<compile_context>
chip_gen: v7x
topology: tpu7x:2x2x1
jax: 0.10.0
libtpu: 0.0.40
codegen_flags: <defaults>
</compile_context>

<pallas_src>
import functools
import math

import jax
import jax.numpy as jnp
from jax import lax
from jax.experimental import pallas as pl
from jax.experimental.pallas import tpu as pltpu


def _gophormer_mha_kernel(x_dst_ref, x_src_ref,
                          wq_ref, bq_ref, wk_ref, bk_ref, wv_ref, bv_ref,
                          adj_ref, bias_ref, out_ref,
                          *, n_heads, out_dim, agg_dtype, approx_recip):
    """One dst-row tile of the Gophormer MHA layer, all heads fused."""
    H, D = n_heads, out_dim
    inv_sqrt_d = jnp.float32(1.0 / math.sqrt(D))

    x_dst = x_dst_ref[...]                       # (TM, in_dim)
    x_src = x_src_ref[...]                       # (N,  in_dim)  resident across tiles

    # Head-fused projections: MXU output width H*D lanes (lane-dense).
    q = jnp.dot(x_dst, wq_ref[...], preferred_element_type=jnp.float32) + bq_ref[...]  # (TM, H*D)
    k = jnp.dot(x_src, wk_ref[...], preferred_element_type=jnp.float32) + bk_ref[...]  # (N,  H*D)
    v = jnp.dot(x_src, wv_ref[...], preferred_element_type=jnp.float32) + bv_ref[...]  # (N,  H*D)

    adj = adj_ref[...].astype(jnp.float32)       # (TM, N)  0/1 mask (bf16 on the wire)
    bias = bias_ref[...]                         # (TM, N)  head-invariant edge bias

    outs = []
    for h in range(H):                           # H is small & static
        lo, hi = h * D, (h + 1) * D
        q_h = q[:, lo:hi]                        # (TM, D)
        k_h = k[:, lo:hi]                        # (N,  D)
        v_h = v[:, lo:hi]                        # (N,  D)

        # score[dst, src] = <Q_h[dst], K_h[src]> / sqrt(D)
        score = lax.dot_general(q_h, k_h, (((1,), (1,)), ((), ())),
                                preferred_element_type=jnp.float32) * inv_sqrt_d

        # biased_exp with clamp(-5, 5); multiplicative mask AFTER exp (must not
        # be folded into the additive bias because clamp runs before exp).
        s = jnp.clip(score + bias, -5.0, 5.0)
        p = jnp.exp(s) * adj                     # (TM, N) f32

        z = jnp.sum(p, axis=-1, keepdims=True)   # (TM, 1)
        w_v = jnp.dot(p.astype(agg_dtype), v_h.astype(agg_dtype),
                      preferred_element_type=jnp.float32)          # (TM, D)

        inv_z = pl.reciprocal(z + 1e-6, approx=approx_recip)       # EUP
        outs.append(w_v * inv_z)

    # One lane-dense (TM, H*D) store instead of H masked D-lane stores.
    out_ref[...] = jnp.concatenate(outs, axis=-1).astype(out_ref.dtype)


def _pick_row_tile(n, cap=256):
    """Largest multiple of 8 that divides n, gives >=2 tiles and is <= cap."""
    best = None
    t = 8
    limit = min(cap, n // 2)
    while t <= limit:
        if n % t == 0:
            best = t
        t += 8
    return best if best is not None else n


def gophormer_mha_pallas(x, Wq, bq, Wk, bk, Wv, bv, Ww, bw, adj, prox,
                         *, n_heads, out_dim, precise=False):
    """Wrapper: parameter packing + tiny edge-bias linear, hot path in Pallas."""
    N, in_dim = x.shape
    H, D = n_heads, out_dim
    HD = H * D

    compute_dtype = jnp.float32 if precise else jnp.bfloat16

    # torch Linear weight is (out_features, in_features); y = x @ W.T + b.
    # view(-1, H, D): feature f -> (head f // D, dim f % D), i.e. W.T columns are
    # already ordered [h0 d0..d(D-1), h1 d0.., ...] -> just transpose & flatten.
    def pack(W, b):
        return W.T.astype(compute_dtype), b.reshape(1, HD).astype(jnp.float32)

    Wq_p, bq_p = pack(Wq, bq)
    Wk_p, bk_p = pack(Wk, bk)
    Wv_p, bv_p = pack(Wv, bv)

    x_in = x.astype(compute_dtype)
    adj_in = adj.astype(jnp.bfloat16)                 # 0/1 exact; halves O(N^2) DMA

    # att_bias: W(ProximityEncoding) -> scalar per edge (head_mode='h0'),
    # shared across heads (single (N, N) array, resident in the kernel).
    R = prox.shape[-1]
    bias_edge = (prox.reshape(N * N, R) @ Ww.T + bw).reshape(N, N).astype(jnp.float32)

    TM = _pick_row_tile(N)
    num_tiles = N // TM

    kernel = functools.partial(
        _gophormer_mha_kernel,
        n_heads=H, out_dim=D,
        agg_dtype=compute_dtype,
        approx_recip=not precise)

    grid_spec = pltpu.PrefetchScalarGridSpec(
        num_scalar_prefetch=0,
        grid=(num_tiles,),
        in_specs=[
            pl.BlockSpec((TM, in_dim), lambda i: (i, 0)),   # x rows (dst) for Q
            pl.BlockSpec((N, in_dim), lambda i: (0, 0)),    # full x for K/V (resident)
            pl.BlockSpec((in_dim, HD), lambda i: (0, 0)),   # Wq (head-fused)
            pl.BlockSpec((1, HD), lambda i: (0, 0)),        # bq
            pl.BlockSpec((in_dim, HD), lambda i: (0, 0)),   # Wk
            pl.BlockSpec((1, HD), lambda i: (0, 0)),        # bk
            pl.BlockSpec((in_dim, HD), lambda i: (0, 0)),   # Wv
            pl.BlockSpec((1, HD), lambda i: (0, 0)),        # bv
            pl.BlockSpec((TM, N), lambda i: (i, 0)),        # adjacency rows (dst)
            pl.BlockSpec((TM, N), lambda i: (i, 0)),        # edge bias rows (dst)
        ],
        out_specs=pl.BlockSpec((TM, HD), lambda i: (i, 0)),  # lane-dense output
    )

    out_flat = pl.pallas_call(
        kernel,
        out_shape=jax.ShapeDtypeStruct((N, HD), jnp.float32),
        grid_spec=grid_spec,
        compiler_params=pltpu.CompilerParams(
            dimension_semantics=("parallel",),
            vmem_limit_bytes=32 * 1024 * 1024),
    )(x_in, x_in, Wq_p, bq_p, Wk_p, bk_p, Wv_p, bv_p, adj_in, bias_edge)

    # match PyTorch h_out shape: (N, n_heads, out_dim)
    return out_flat.reshape(N, H, D)


def gophormer_mha_reference(x, Wq, bq, Wk, bk, Wv, bv, Ww, bw, adj, prox,
                            *, n_heads, out_dim):
    """Plain-JAX reference (dense form of the DGL forward)."""
    N = x.shape[0]
    H, D = n_heads, out_dim
    Q = (x @ Wq.T + bq).reshape(N, H, D)
    K = (x @ Wk.T + bk).reshape(N, H, D)
    V = (x @ Wv.T + bv).reshape(N, H, D)

    score = jnp.einsum('qhd,khd->qkh', Q, K) / math.sqrt(D)     # (dst, src, H)
    att_bias = (prox @ Ww.T + bw)                                # (N, N, 1)
    s = jnp.clip(score + att_bias, -5.0, 5.0)
    score_soft = jnp.exp(s) * adj[..., None]                     # mask non-edges

    z = jnp.sum(score_soft, axis=1)                              # (N, H)
    wV = jnp.einsum('qkh,khd->qhd', score_soft, V)               # (N, H, D)
    return wV / (z[..., None] + 1e-6)


if __name__ == "__main__":
    # Small synthetic configuration.
    N_NODES = 16
    IN_DIM = 32
    OUT_DIM = 8
    N_HEADS = 4
    K_HOPS = 1
    NUM_RELATIONS = K_HOPS + 1          # include_identity=True, global_nodes=0

    key = jax.random.PRNGKey(0)
    keys = jax.random.split(key, 12)

    def linear_init(kw, kb, out_f, in_f):
        bound = 1.0 / math.sqrt(in_f)
        W = jax.random.uniform(kw, (out_f, in_f), jnp.float32, -bound, bound)
        b = jax.random.uniform(kb, (out_f,), jnp.float32, -bound, bound)
        return W, b

    Wq, bq = linear_init(keys[0], keys[1], OUT_DIM * N_HEADS, IN_DIM)
    Wk, bk = linear_init(keys[2], keys[3], OUT_DIM * N_HEADS, IN_DIM)
    Wv, bv = linear_init(keys[4], keys[5], OUT_DIM * N_HEADS, IN_DIM)
    # W: num_relations -> 1 (head_mode='h0'); weight constant-initialized to 0
    # as in the PyTorch module, bias uses default Linear init.
    Ww = jnp.zeros((1, NUM_RELATIONS), jnp.float32)
    bw = jax.random.uniform(keys[6], (1,), jnp.float32,
                            -1.0 / math.sqrt(NUM_RELATIONS),
                            1.0 / math.sqrt(NUM_RELATIONS))

    # Node features, dense adjacency (with self-loops), proximity encodings.
    x = jax.random.normal(keys[7], (N_NODES, IN_DIM), jnp.float32)
    adj = (jax.random.uniform(keys[8], (N_NODES, N_NODES)) < 0.4).astype(jnp.float32)
    adj = jnp.maximum(adj, jnp.eye(N_NODES, dtype=jnp.float32))   # self-loops
    prox = jax.random.normal(keys[9], (N_NODES, N_NODES, NUM_RELATIONS),
                             jnp.float32)

    ref = gophormer_mha_reference(x, Wq, bq, Wk, bk, Wv, bv, Ww, bw, adj, prox,
                                  n_heads=N_HEADS, out_dim=OUT_DIM)

    # Precise path (f32 MXU inputs, exact reciprocal): tight check of semantics.
    out_f32 = gophormer_mha_pallas(x, Wq, bq, Wk, bk, Wv, bv, Ww, bw, adj, prox,
                                   n_heads=N_HEADS, out_dim=OUT_DIM, precise=True)
    out_f32 = jax.block_until_ready(out_f32)
    assert out_f32.shape == (N_NODES, N_HEADS, OUT_DIM), out_f32.shape
    assert jnp.allclose(out_f32, ref, atol=5e-4, rtol=5e-4), \
        float(jnp.max(jnp.abs(out_f32 - ref)))

    # Performance path (bf16 MXU inputs, f32 accumulate, approx reciprocal).
    out_bf16 = gophormer_mha_pallas(x, Wq, bq, Wk, bk, Wv, bv, Ww, bw, adj, prox,
                                    n_heads=N_HEADS, out_dim=OUT_DIM, precise=False)
    out_bf16 = jax.block_until_ready(out_bf16)
    assert out_bf16.shape == (N_NODES, N_HEADS, OUT_DIM), out_bf16.shape
    assert jnp.allclose(out_bf16, ref, atol=5e-2, rtol=5e-2), \
        float(jnp.max(jnp.abs(out_bf16 - ref)))

    print("KERNEL_OK")
</pallas_src>

<mosaic_0001>
module attributes {stable_mosaic.version = 11 : i64} {
  func.func @_gophormer_mha_kernel(%arg0: i32, %arg1: memref<8x32xf32, #tpu.memory_space<vmem>>, %arg2: memref<16x32xf32, #tpu.memory_space<vmem>>, %arg3: memref<32x32xf32, #tpu.memory_space<vmem>>, %arg4: memref<1x32xf32, #tpu.memory_space<vmem>>, %arg5: memref<32x32xf32, #tpu.memory_space<vmem>>, %arg6: memref<1x32xf32, #tpu.memory_space<vmem>>, %arg7: memref<32x32xf32, #tpu.memory_space<vmem>>, %arg8: memref<1x32xf32, #tpu.memory_space<vmem>>, %arg9: memref<8x16xbf16, #tpu.memory_space<vmem>>, %arg10: memref<8x16xf32, #tpu.memory_space<vmem>>, %arg11: memref<8x32xf32, #tpu.memory_space<vmem>>) attributes {dimension_semantics = [#tpu.dimension_semantics<parallel>], iteration_bounds = array<i64: 2>, scalar_prefetch = 0 : i64, scratch_operands = 0 : i64, tpu.core_type = #tpu.core_type<tc>, window_params = [{transform_indices = @transform_0, window_bounds = array<i64: 8, 32>}, {pipeline_mode = #tpu.pipeline_mode<synchronous>, transform_indices = @transform_1, window_bounds = array<i64: 16, 32>}, {pipeline_mode = #tpu.pipeline_mode<synchronous>, transform_indices = @transform_2, window_bounds = array<i64: 32, 32>}, {pipeline_mode = #tpu.pipeline_mode<synchronous>, transform_indices = @transform_3, window_bounds = array<i64: 1, 32>}, {pipeline_mode = #tpu.pipeline_mode<synchronous>, transform_indices = @transform_4, window_bounds = array<i64: 32, 32>}, {pipeline_mode = #tpu.pipeline_mode<synchronous>, transform_indices = @transform_5, window_bounds = array<i64: 1, 32>}, {pipeline_mode = #tpu.pipeline_mode<synchronous>, transform_indices = @transform_6, window_bounds = array<i64: 32, 32>}, {pipeline_mode = #tpu.pipeline_mode<synchronous>, transform_indices = @transform_7, window_bounds = array<i64: 1, 32>}, {transform_indices = @transform_8, window_bounds = array<i64: 8, 16>}, {transform_indices = @transform_9, window_bounds = array<i64: 8, 16>}, {transform_indices = @transform_10, window_bounds = array<i64: 8, 32>}]} {
    %c0 = arith.constant 0 : index
    %c0_0 = arith.constant 0 : index
    %0 = vector.load %arg1[%c0, %c0_0] : memref<8x32xf32, #tpu.memory_space<vmem>>, vector<8x32xf32>
    %c0_1 = arith.constant 0 : index
    %c0_2 = arith.constant 0 : index
    %1 = vector.load %arg2[%c0_1, %c0_2] : memref<16x32xf32, #tpu.memory_space<vmem>>, vector<16x32xf32>
    %c0_3 = arith.constant 0 : index
    %c0_4 = arith.constant 0 : index
    %2 = vector.load %arg3[%c0_3, %c0_4] : memref<32x32xf32, #tpu.memory_space<vmem>>, vector<32x32xf32>
    %cst = arith.constant dense<0.000000e+00> : vector<8x32xf32>
    %3 = tpu.matmul %0, %2, %cst {dimension_numbers = #tpu.dot_dimension_numbers<[1], [0], [0], [1], [0, 0, 1, 1], [], []>} : vector<8x32xf32>, vector<32x32xf32>, vector<8x32xf32> -> vector<8x32xf32>
    %c0_5 = arith.constant 0 : index
    %c0_6 = arith.constant 0 : index
    %4 = vector.load %arg4[%c0_5, %c0_6] : memref<1x32xf32, #tpu.memory_space<vmem>>, vector<1x32xf32>
    %5 = vector.broadcast %4 : vector<1x32xf32> to vector<8x32xf32>
    %6 = arith.addf %3, %5 : vector<8x32xf32>
    %c0_7 = arith.constant 0 : index
    %c0_8 = arith.constant 0 : index
    %7 = vector.load %arg5[%c0_7, %c0_8] : memref<32x32xf32, #tpu.memory_space<vmem>>, vector<32x32xf32>
    %cst_9 = arith.constant dense<0.000000e+00> : vector<16x32xf32>
    %8 = tpu.matmul %1, %7, %cst_9 {dimension_numbers = #tpu.dot_dimension_numbers<[1], [0], [0], [1], [0, 0, 1, 1], [], []>} : vector<16x32xf32>, vector<32x32xf32>, vector<16x32xf32> -> vector<16x32xf32>
    %c0_10 = arith.constant 0 : index
    %c0_11 = arith.constant 0 : index
    %9 = vector.load %arg6[%c0_10, %c0_11] : memref<1x32xf32, #tpu.memory_space<vmem>>, vector<1x32xf32>
    %10 = vector.broadcast %9 : vector<1x32xf32> to vector<16x32xf32>
    %11 = arith.addf %8, %10 : vector<16x32xf32>
    %c0_12 = arith.constant 0 : index
    %c0_13 = arith.constant 0 : index
    %12 = vector.load %arg7[%c0_12, %c0_13] : memref<32x32xf32, #tpu.memory_space<vmem>>, vector<32x32xf32>
    %cst_14 = arith.constant dense<0.000000e+00> : vector<16x32xf32>
    %13 = tpu.matmul %1, %12, %cst_14 {dimension_numbers = #tpu.dot_dimension_numbers<[1], [0], [0], [1], [0, 0, 1, 1], [], []>} : vector<16x32xf32>, vector<32x32xf32>, vector<16x32xf32> -> vector<16x32xf32>
    %c0_15 = arith.constant 0 : index
    %c0_16 = arith.constant 0 : index
    %14 = vector.load %arg8[%c0_15, %c0_16] : memref<1x32xf32, #tpu.memory_space<vmem>>, vector<1x32xf32>
    %15 = vector.broadcast %14 : vector<1x32xf32> to vector<16x32xf32>
    %16 = arith.addf %13, %15 : vector<16x32xf32>
    %c0_17 = arith.constant 0 : index
    %c0_18 = arith.constant 0 : index
    %17 = vector.load %arg9[%c0_17, %c0_18] : memref<8x16xbf16, #tpu.memory_space<vmem>>, vector<8x16xbf16>
    %18 = arith.extf %17 : vector<8x16xbf16> to vector<8x16xf32>
    %c0_19 = arith.constant 0 : index
    %c0_20 = arith.constant 0 : index
    %19 = vector.load %arg10[%c0_19, %c0_20] : memref<8x16xf32, #tpu.memory_space<vmem>>, vector<8x16xf32>
    %20 = vector.extract_strided_slice %6 {offsets = [0, 0], sizes = [8, 8], strides = [1, 1]} : vector<8x32xf32> to vector<8x8xf32>
    %21 = vector.extract_strided_slice %11 {offsets = [0, 0], sizes = [16, 8], strides = [1, 1]} : vector<16x32xf32> to vector<16x8xf32>
    %22 = vector.extract_strided_slice %16 {offsets = [0, 0], sizes = [16, 8], strides = [1, 1]} : vector<16x32xf32> to vector<16x8xf32>
    %cst_21 = arith.constant dense<0.000000e+00> : vector<8x16xf32>
    %23 = tpu.matmul %20, %21, %cst_21 {dimension_numbers = #tpu.dot_dimension_numbers<[1], [1], [0], [0], [0, 0, 1, 0], [], []>} : vector<8x8xf32>, vector<16x8xf32>, vector<8x16xf32> -> vector<8x16xf32>
    %cst_22 = arith.constant 0.353553385 : f32
    %24 = vector.broadcast %cst_22 : f32 to vector<8x16xf32>
    %25 = arith.mulf %23, %24 : vector<8x16xf32>
    %26 = arith.addf %25, %19 : vector<8x16xf32>
    %cst_23 = arith.constant -5.000000e+00 : f32
    %cst_24 = arith.constant 5.000000e+00 : f32
    %27 = vector.broadcast %cst_23 : f32 to vector<8x16xf32>
    %28 = arith.maximumf %27, %26 : vector<8x16xf32>
    %29 = vector.broadcast %cst_24 : f32 to vector<8x16xf32>
    %30 = arith.minimumf %29, %28 : vector<8x16xf32>
    %31 = math.exp %30 : vector<8x16xf32>
    %32 = arith.mulf %31, %18 : vector<8x16xf32>
    %cst_25 = arith.constant dense<0.000000e+00> : vector<8xf32>
    %33 = vector.multi_reduction <add>, %32, %cst_25 [1] : vector<8x16xf32> to vector<8xf32>
    %34 = vector.shape_cast %33 : vector<8xf32> to vector<8x1xf32>
    %cst_26 = arith.constant dense<0.000000e+00> : vector<8x8xf32>
    %35 = tpu.matmul %32, %22, %cst_26 {dimension_numbers = #tpu.dot_dimension_numbers<[1], [0], [0], [1], [0, 0, 1, 1], [], []>} : vector<8x16xf32>, vector<16x8xf32>, vector<8x8xf32> -> vector<8x8xf32>
    %cst_27 = arith.constant 9.99999997E-7 : f32
    %36 = vector.broadcast %cst_27 : f32 to vector<8x1xf32>
    %37 = arith.addf %34, %36 : vector<8x1xf32>
    %38 = tpu.reciprocal %37 : vector<8x1xf32> -> vector<8x1xf32>
    %39 = vector.broadcast %38 : vector<8x1xf32> to vector<8x8xf32>
    %40 = arith.mulf %35, %39 : vector<8x8xf32>
    %41 = vector.extract_strided_slice %6 {offsets = [0, 8], sizes = [8, 8], strides = [1, 1]} : vector<8x32xf32> to vector<8x8xf32>
    %42 = vector.extract_strided_slice %11 {offsets = [0, 8], sizes = [16, 8], strides = [1, 1]} : vector<16x32xf32> to vector<16x8xf32>
    %43 = vector.extract_strided_slice %16 {offsets = [0, 8], sizes = [16, 8], strides = [1, 1]} : vector<16x32xf32> to vector<16x8xf32>
    %cst_28 = arith.constant dense<0.000000e+00> : vector<8x16xf32>
    %44 = tpu.matmul %41, %42, %cst_28 {dimension_numbers = #tpu.dot_dimension_numbers<[1], [1], [0], [0], [0, 0, 1, 0], [], []>} : vector<8x8xf32>, vector<16x8xf32>, vector<8x16xf32> -> vector<8x16xf32>
    %cst_29 = arith.constant 0.353553385 : f32
    %45 = vector.broadcast %cst_29 : f32 to vector<8x16xf32>
    %46 = arith.mulf %44, %45 : vector<8x16xf32>
    %47 = arith.addf %46, %19 : vector<8x16xf32>
    %cst_30 = arith.constant -5.000000e+00 : f32
    %cst_31 = arith.constant 5.000000e+00 : f32
    %48 = vector.broadcast %cst_30 : f32 to vector<8x16xf32>
    %49 = arith.maximumf %48, %47 : vector<8x16xf32>
    %50 = vector.broadcast %cst_31 : f32 to vector<8x16xf32>
    %51 = arith.minimumf %50, %49 : vector<8x16xf32>
    %52 = math.exp %51 : vector<8x16xf32>
    %53 = arith.mulf %52, %18 : vector<8x16xf32>
    %cst_32 = arith.constant dense<0.000000e+00> : vector<8xf32>
    %54 = vector.multi_reduction <add>, %53, %cst_32 [1] : vector<8x16xf32> to vector<8xf32>
    %55 = vector.shape_cast %54 : vector<8xf32> to vector<8x1xf32>
    %cst_33 = arith.constant dense<0.000000e+00> : vector<8x8xf32>
    %56 = tpu.matmul %53, %43, %cst_33 {dimension_numbers = #tpu.dot_dimension_numbers<[1], [0], [0], [1], [0, 0, 1, 1], [], []>} : vector<8x16xf32>, vector<16x8xf32>, vector<8x8xf32> -> vector<8x8xf32>
    %cst_34 = arith.constant 9.99999997E-7 : f32
    %57 = vector.broadcast %cst_34 : f32 to vector<8x1xf32>
    %58 = arith.addf %55, %57 : vector<8x1xf32>
    %59 = tpu.reciprocal %58 : vector<8x1xf32> -> vector<8x1xf32>
    %60 = vector.broadcast %59 : vector<8x1xf32> to vector<8x8xf32>
    %61 = arith.mulf %56, %60 : vector<8x8xf32>
    %62 = vector.extract_strided_slice %6 {offsets = [0, 16], sizes = [8, 8], strides = [1, 1]} : vector<8x32xf32> to vector<8x8xf32>
    %63 = vector.extract_strided_slice %11 {offsets = [0, 16], sizes = [16, 8], strides = [1, 1]} : vector<16x32xf32> to vector<16x8xf32>
    %64 = vector.extract_strided_slice %16 {offsets = [0, 16], sizes = [16, 8], strides = [1, 1]} : vector<16x32xf32> to vector<16x8xf32>
    %cst_35 = arith.constant dense<0.000000e+00> : vector<8x16xf32>
    %65 = tpu.matmul %62, %63, %cst_35 {dimension_numbers = #tpu.dot_dimension_numbers<[1], [1], [0], [0], [0, 0, 1, 0], [], []>} : vector<8x8xf32>, vector<16x8xf32>, vector<8x16xf32> -> vector<8x16xf32>
    %cst_36 = arith.constant 0.353553385 : f32
    %66 = vector.broadcast %cst_36 : f32 to vector<8x16xf32>
    %67 = arith.mulf %65, %66 : vector<8x16xf32>
    %68 = arith.addf %67, %19 : vector<8x16xf32>
    %cst_37 = arith.constant -5.000000e+00 : f32
    %cst_38 = arith.constant 5.000000e+00 : f32
    %69 = vector.broadcast %cst_37 : f32 to vector<8x16xf32>
    %70 = arith.maximumf %69, %68 : vector<8x16xf32>
    %71 = vector.broadcast %cst_38 : f32 to vector<8x16xf32>
    %72 = arith.minimumf %71, %70 : vector<8x16xf32>
    %73 = math.exp %72 : vector<8x16xf32>
    %74 = arith.mulf %73, %18 : vector<8x16xf32>
    %cst_39 = arith.constant dense<0.000000e+00> : vector<8xf32>
    %75 = vector.multi_reduction <add>, %74, %cst_39 [1] : vector<8x16xf32> to vector<8xf32>
    %76 = vector.shape_cast %75 : vector<8xf32> to vector<8x1xf32>
    %cst_40 = arith.constant dense<0.000000e+00> : vector<8x8xf32>
    %77 = tpu.matmul %74, %64, %cst_40 {dimension_numbers = #tpu.dot_dimension_numbers<[1], [0], [0], [1], [0, 0, 1, 1], [], []>} : vector<8x16xf32>, vector<16x8xf32>, vector<8x8xf32> -> vector<8x8xf32>
    %cst_41 = arith.constant 9.99999997E-7 : f32
    %78 = vector.broadcast %cst_41 : f32 to vector<8x1xf32>
    %79 = arith.addf %76, %78 : vector<8x1xf32>
    %80 = tpu.reciprocal %79 : vector<8x1xf32> -> vector<8x1xf32>
    %81 = vector.broadcast %80 : vector<8x1xf32> to vector<8x8xf32>
    %82 = arith.mulf %77, %81 : vector<8x8xf32>
    %83 = vector.extract_strided_slice %6 {offsets = [0, 24], sizes = [8, 8], strides = [1, 1]} : vector<8x32xf32> to vector<8x8xf32>
    %84 = vector.extract_strided_slice %11 {offsets = [0, 24], sizes = [16, 8], strides = [1, 1]} : vector<16x32xf32> to vector<16x8xf32>
    %85 = vector.extract_strided_slice %16 {offsets = [0, 24], sizes = [16, 8], strides = [1, 1]} : vector<16x32xf32> to vector<16x8xf32>
    %cst_42 = arith.constant dense<0.000000e+00> : vector<8x16xf32>
    %86 = tpu.matmul %83, %84, %cst_42 {dimension_numbers = #tpu.dot_dimension_numbers<[1], [1], [0], [0], [0, 0, 1, 0], [], []>} : vector<8x8xf32>, vector<16x8xf32>, vector<8x16xf32> -> vector<8x16xf32>
    %cst_43 = arith.constant 0.353553385 : f32
    %87 = vector.broadcast %cst_43 : f32 to vector<8x16xf32>
    %88 = arith.mulf %86, %87 : vector<8x16xf32>
    %89 = arith.addf %88, %19 : vector<8x16xf32>
    %cst_44 = arith.constant -5.000000e+00 : f32
    %cst_45 = arith.constant 5.000000e+00 : f32
    %90 = vector.broadcast %cst_44 : f32 to vector<8x16xf32>
    %91 = arith.maximumf %90, %89 : vector<8x16xf32>
    %92 = vector.broadcast %cst_45 : f32 to vector<8x16xf32>
    %93 = arith.minimumf %92, %91 : vector<8x16xf32>
    %94 = math.exp %93 : vector<8x16xf32>
    %95 = arith.mulf %94, %18 : vector<8x16xf32>
    %cst_46 = arith.constant dense<0.000000e+00> : vector<8xf32>
    %96 = vector.multi_reduction <add>, %95, %cst_46 [1] : vector<8x16xf32> to vector<8xf32>
    %97 = vector.shape_cast %96 : vector<8xf32> to vector<8x1xf32>
    %cst_47 = arith.constant dense<0.000000e+00> : vector<8x8xf32>
    %98 = tpu.matmul %95, %85, %cst_47 {dimension_numbers = #tpu.dot_dimension_numbers<[1], [0], [0], [1], [0, 0, 1, 1], [], []>} : vector<8x16xf32>, vector<16x8xf32>, vector<8x8xf32> -> vector<8x8xf32>
    %cst_48 = arith.constant 9.99999997E-7 : f32
    %99 = vector.broadcast %cst_48 : f32 to vector<8x1xf32>
    %100 = arith.addf %97, %99 : vector<8x1xf32>
    %101 = tpu.reciprocal %100 : vector<8x1xf32> -> vector<8x1xf32>
    %102 = vector.broadcast %101 : vector<8x1xf32> to vector<8x8xf32>
    %103 = arith.mulf %98, %102 : vector<8x8xf32>
    %104 = tpu.concatenate %40, %61, %82, %103 in 1 : vector<8x8xf32>, vector<8x8xf32>, vector<8x8xf32>, vector<8x8xf32> -> vector<8x32xf32>
    %c0_49 = arith.constant 0 : index
    %c0_50 = arith.constant 0 : index
    %105 = vector.load %arg11[%c0_49, %c0_50] : memref<8x32xf32, #tpu.memory_space<vmem>>, vector<8x32xf32>
    tpu.vector_store %arg11[%c0_49, %c0_50], %104 {strides = array<i32>} : memref<8x32xf32, #tpu.memory_space<vmem>>, vector<8x32xf32>,
    return
  }
  func.func @transform_0(%arg0: i32) -> (i32, i32) {
    %c0_i32 = arith.constant 0 : i32
    %c0_i32_0 = arith.constant 0 : i32
    return %arg0, %c0_i32 : i32, i32
  }
  func.func @transform_1(%arg0: i32) -> (i32, i32) {
    %c0_i32 = arith.constant 0 : i32
    %c0_i32_0 = arith.constant 0 : i32
    %c0_i32_1 = arith.constant 0 : i32
    return %c0_i32, %c0_i32_0 : i32, i32
  }
  func.func @transform_2(%arg0: i32) -> (i32, i32) {
    %c0_i32 = arith.constant 0 : i32
    %c0_i32_0 = arith.constant 0 : i32
    %c0_i32_1 = arith.constant 0 : i32
    return %c0_i32, %c0_i32_0 : i32, i32
  }
  func.func @transform_3(%arg0: i32) -> (i32, i32) {
    %c0_i32 = arith.constant 0 : i32
    %c0_i32_0 = arith.constant 0 : i32
    %c0_i32_1 = arith.constant 0 : i32
    return %c0_i32, %c0_i32_0 : i32, i32
  }
  func.func @transform_4(%arg0: i32) -> (i32, i32) {
    %c0_i32 = arith.constant 0 : i32
    %c0_i32_0 = arith.constant 0 : i32
    %c0_i32_1 = arith.constant 0 : i32
    return %c0_i32, %c0_i32_0 : i32, i32
  }
  func.func @transform_5(%arg0: i32) -> (i32, i32) {
    %c0_i32 = arith.constant 0 : i32
    %c0_i32_0 = arith.constant 0 : i32
    %c0_i32_1 = arith.constant 0 : i32
    return %c0_i32, %c0_i32_0 : i32, i32
  }
  func.func @transform_6(%arg0: i32) -> (i32, i32) {
    %c0_i32 = arith.constant 0 : i32
    %c0_i32_0 = arith.constant 0 : i32
    %c0_i32_1 = arith.constant 0 : i32
    return %c0_i32, %c0_i32_0 : i32, i32
  }
  func.func @transform_7(%arg0: i32) -> (i32, i32) {
    %c0_i32 = arith.constant 0 : i32
    %c0_i32_0 = arith.constant 0 : i32
    %c0_i32_1 = arith.constant 0 : i32
    return %c0_i32, %c0_i32_0 : i32, i32
  }
  func.func @transform_8(%arg0: i32) -> (i32, i32) {
    %c0_i32 = arith.constant 0 : i32
    %c0_i32_0 = arith.constant 0 : i32
    return %arg0, %c0_i32 : i32, i32
  }
  func.func @transform_9(%arg0: i32) -> (i32, i32) {
    %c0_i32 = arith.constant 0 : i32
    %c0_i32_0 = arith.constant 0 : i32
    return %arg0, %c0_i32 : i32, i32
  }
  func.func @transform_10(%arg0: i32) -> (i32, i32) {
    %c0_i32 = arith.constant 0 : i32
    %c0_i32_0 = arith.constant 0 : i32
    return %arg0, %c0_i32 : i32, i32
  }
}

</mosaic_0001>

<llo_original>
// kernel: tpu_custom_call.1
$region0: #{tpu_custom_call.1}
  #allocation0 [shape = 'u32[]', space=smem, size = 0x4, offset = 0x4, fixed_abs, tag = 'smem constant byte address 0x4 - core index']
  #allocation1 [shape = 'u32[144,128]{1,0:T(1,128)}', space=vmem, size = 0x12000, scoped, tag = 'internal scratch']
  %s0 = inlined_call_operand.hbm [shape: f32[16,32], index: 0, kind: input, shape index: {}]
  %s1 = inlined_call_operand.hbm [shape: f32[16,32], index: 1, kind: input, shape index: {}]
  %s2 = inlined_call_operand.hbm [shape: f32[32,32], index: 2, kind: input, shape index: {}]
  %s3 = inlined_call_operand.vmem [shape: f32[1,32], index: 3, kind: input, shape index: {}]
  %s4 = inlined_call_operand.hbm [shape: f32[32,32], index: 4, kind: input, shape index: {}]
  %s5 = inlined_call_operand.vmem [shape: f32[1,32], index: 5, kind: input, shape index: {}]
  %s6 = inlined_call_operand.hbm [shape: f32[32,32], index: 6, kind: input, shape index: {}]
  %s7 = inlined_call_operand.vmem [shape: f32[1,32], index: 7, kind: input, shape index: {}]
  %s8 = inlined_call_operand.vmem [shape: bf16[16,16], index: 8, kind: input, shape index: {}]
  %s9 = inlined_call_operand.vmem [shape: f32[16,16], index: 9, kind: input, shape index: {}]
  %s10 = inlined_call_operand.hbm [shape: f32[16,32], index: 10, kind: output, shape index: {}]
  %s11 = sld [smem:[#allocation0]]
  $region93: #{tpu_custom_call.1} parent=0
    _
  %s13 = ssub.s32 1, %s11
  %s14 = scalar_select 0, %s13, %s11
  $region1: #{tpu_custom_call.1} parent=0
    #allocation2 [shape = 'u8[8192]{0}', space=vmem, size = 0x2000, scoped, tag = 'input window, operand 0']
    #allocation3 [shape = 's32[2]{0}', space=sflag, size = 0x8, scoped, tag = 'scoped memory for tpu_custom_call.1']
    #allocation4 [shape = 's32[2]{0}', space=sflag, size = 0x8, scoped, tag = 'scoped memory for tpu_custom_call.1']
    #allocation5 [shape = 'u8[8192]{0}', space=vmem, size = 0x2000, scoped, tag = 'input window, operand 1, single buffered']
    #allocation6 [shape = 's32[1]{0}', space=sflag, size = 0x4, scoped, tag = 'scoped memory for tpu_custom_call.1']
    #allocation7 [shape = 'u8[16384]{0}', space=vmem, size = 0x4000, scoped, tag = 'input window, operand 2, single buffered']
    #allocation8 [shape = 'u8[16384]{0}', space=vmem, size = 0x4000, scoped, tag = 'input window, operand 4, single buffered']
    #allocation9 [shape = 's32[1]{0}', space=sflag, size = 0x4, scoped, tag = 'scoped memory for tpu_custom_call.1']
    #allocation10 [shape = 'u8[16384]{0}', space=vmem, size = 0x4000, scoped, tag = 'input window, operand 6, single buffered']
    #allocation11 [shape = 'u8[8192]{0}', space=vmem, size = 0x2000, scoped, tag = 'output window, operand 0']
    %15 = vsyncpa [#allocation3], 0
    %s16 = scalar_lea.sflag [#allocation3], 1
    %17 = vsyncpa %s16, 0
    %18 = vsyncpa [#allocation6], 0
    %19 = vsyncpa [#allocation9], 0
    %20 = vsyncpa [#allocation4], 0
    %s21 = scalar_lea.sflag [#allocation4], 1
    %22 = vsyncpa %s21, 0
    loop: start=0, step=1, limit=4
    $region2: #{tpu_custom_call.1} parent=1 // loop_pre_header
      _
    $region3: #{tpu_custom_call.1} parent=1 // loop_header
      %s24 = sphi 0, %s28
      %p25 = scmp.ge.s32.totalorder %s24, 4
      %s34 = sphi 0, %s36
      %s37 = sphi 0, %s34
      %s38 = sphi 0, %s37
      %s54 = sphi 0, %s38
      %s58 = sphi 0, %s58
      %s60 = sphi 0, %s58
      %s61 = sphi 0, %s60
      %s75 = sphi 0, %s61
      %s79 = sphi 0, %s79
      %s81 = sphi 0, %s79
      %s82 = sphi 0, %s81
      %s96 = sphi 0, %s82
      %s100 = sphi 0, %s100
      %s102 = sphi 0, %s100
      %s103 = sphi 0, %s102
      %s117 = sphi 0, %s103
      %s121 = sphi 0, %s121
      %s123 = sphi 0, %s121
      %s124 = sphi 0, %s123
      %s138 = sphi 0, %s124
      %s142 = sphi 0, %s142
      %s144 = sphi 0, %s142
      %s145 = sphi 0, %s144
      %s159 = sphi 0, %s145
      %s163 = sphi 0, %s163
      %s165 = sphi 0, %s163
      %s166 = sphi 0, %s165
      %s180 = sphi 0, %s166
      %s184 = sphi 0, %s184
      %s186 = sphi 0, %s184
      %s187 = sphi 0, %s186
      %s201 = sphi 0, %s187
      %s207 = sphi 0, %s209
      %s210 = sphi 0, %s207
      %s211 = sphi 0, %s210
      %s227 = sphi 0, %s211
      %s233 = sphi 0, %s235
      %s236 = sphi 0, %s233
      %s237 = sphi 0, %s236
      %s253 = sphi 0, %s237
      %s259 = sphi 0, %s261
      %s262 = sphi 0, %s259
      %s263 = sphi 0, %s262
      %s279 = sphi 0, %s263
    $region4: #{tpu_custom_call.1} parent=1 // loop_header_branch
      %27 = sbr.rel (%p25) target = $region8
    $region5: #{tpu_custom_call.1} parent=1 // loop_body
      %s29 = ssub.s32 %s24, 1
      %s30 = ssub.s32 %s24, 2
      %s31 = sadd.s32 %s24, 1
      %s32 = ssub.s32 %s24, %s31
      %p33 = scmp.eq.s32.totalorder %s32, 0
      %s35 = sadd.s32 %s34, 1
      %s36 = scalar_select %p33, %s34, %s35
      %p39 = pneg %p33
      %p40 = scmp.eq.s32.totalorder %s24, 1
      %p41 = por %p39, %p40
      %p42 = scmp.ne.s32.totalorder %s34, %s37
      %p43 = scmp.eq.s32.totalorder %s24, 0
      %p44 = por %p42, %p43
      %p45 = scmp.ne.s32.totalorder %s34, %s37
      %p46 = scmp.eq.s32.totalorder %s29, 1
      %p47 = por %p45, %p46
      %p48 = scmp.ne.s32.totalorder %s37, %s38
      %p49 = scmp.eq.s32.totalorder %s29, 0
      %p50 = por %p48, %p49
      %p51 = scmp.ne.s32.totalorder %s37, %s38
      %p52 = scmp.eq.s32.totalorder %s30, 1
      %p53 = por %p51, %p52
      %p55 = scmp.ne.s32.totalorder %s38, %s54
      %p56 = scmp.eq.s32.totalorder %s30, 0
      %p57 = por %p55, %p56
      %s59 = sadd.s32 %s58, 1
      %p62 = scmp.eq.s32.totalorder %s24, 1
      %p63 = scmp.ne.s32.totalorder %s58, %s60
      %p64 = scmp.eq.s32.totalorder %s24, 0
      %p65 = por %p63, %p64
      %p66 = scmp.ne.s32.totalorder %s58, %s60
      %p67 = scmp.eq.s32.totalorder %s29, 1
      %p68 = por %p66, %p67
      %p69 = scmp.ne.s32.totalorder %s60, %s61
      %p70 = scmp.eq.s32.totalorder %s29, 0
      %p71 = por %p69, %p70
      %p72 = scmp.ne.s32.totalorder %s60, %s61
      %p73 = scmp.eq.s32.totalorder %s30, 1
      %p74 = por %p72, %p73
      %p76 = scmp.ne.s32.totalorder %s61, %s75
      %p77 = scmp.eq.s32.totalorder %s30, 0
      %p78 = por %p76, %p77
      %s80 = sadd.s32 %s79, 1
      %p83 = scmp.eq.s32.totalorder %s24, 1
      %p84 = scmp.ne.s32.totalorder %s79, %s81
      %p85 = scmp.eq.s32.totalorder %s24, 0
      %p86 = por %p84, %p85
      %p87 = scmp.ne.s32.totalorder %s79, %s81
      %p88 = scmp.eq.s32.totalorder %s29, 1
      %p89 = por %p87, %p88
      %p90 = scmp.ne.s32.totalorder %s81, %s82
      %p91 = scmp.eq.s32.totalorder %s29, 0
      %p92 = por %p90, %p91
      %p93 = scmp.ne.s32.totalorder %s81, %s82
      %p94 = scmp.eq.s32.totalorder %s30, 1
      %p95 = por %p93, %p94
      %p97 = scmp.ne.s32.totalorder %s82, %s96
      %p98 = scmp.eq.s32.totalorder %s30, 0
      %p99 = por %p97, %p98
      %s101 = sadd.s32 %s100, 1
      %p104 = scmp.eq.s32.totalorder %s24, 1
      %p105 = scmp.ne.s32.totalorder %s100, %s102
      %p106 = scmp.eq.s32.totalorder %s24, 0
      %p107 = por %p105, %p106
      %p108 = scmp.ne.s32.totalorder %s100, %s102
      %p109 = scmp.eq.s32.totalorder %s29, 1
      %p110 = por %p108, %p109
      %p111 = scmp.ne.s32.totalorder %s102, %s103
      %p112 = scmp.eq.s32.totalorder %s29, 0
      %p113 = por %p111, %p112
      %p114 = scmp.ne.s32.totalorder %s102, %s103
      %p115 = scmp.eq.s32.totalorder %s30, 1
      %p116 = por %p114, %p115
      %p118 = scmp.ne.s32.totalorder %s103, %s117
      %p119 = scmp.eq.s32.totalorder %s30, 0
      %p120 = por %p118, %p119
      %s122 = sadd.s32 %s121, 1
      %p125 = scmp.eq.s32.totalorder %s24, 1
      %p126 = scmp.ne.s32.totalorder %s121, %s123
      %p127 = scmp.eq.s32.totalorder %s24, 0
      %p128 = por %p126, %p127
      %p129 = scmp.ne.s32.totalorder %s121, %s123
      %p130 = scmp.eq.s32.totalorder %s29, 1
      %p131 = por %p129, %p130
      %p132 = scmp.ne.s32.totalorder %s123, %s124
      %p133 = scmp.eq.s32.totalorder %s29, 0
      %p134 = por %p132, %p133
      %p135 = scmp.ne.s32.totalorder %s123, %s124
      %p136 = scmp.eq.s32.totalorder %s30, 1
      %p137 = por %p135, %p136
      %p139 = scmp.ne.s32.totalorder %s124, %s138
      %p140 = scmp.eq.s32.totalorder %s30, 0
      %p141 = por %p139, %p140
      %s143 = sadd.s32 %s142, 1
      %p146 = scmp.eq.s32.totalorder %s24, 1
      %p147 = scmp.ne.s32.totalorder %s142, %s144
      %p148 = scmp.eq.s32.totalorder %s24, 0
      %p149 = por %p147, %p148
      %p150 = scmp.ne.s32.totalorder %s142, %s144
      %p151 = scmp.eq.s32.totalorder %s29, 1
      %p152 = por %p150, %p151
      %p153 = scmp.ne.s32.totalorder %s144, %s145
      %p154 = scmp.eq.s32.totalorder %s29, 0
      %p155 = por %p153, %p154
      %p156 = scmp.ne.s32.totalorder %s144, %s145
      %p157 = scmp.eq.s32.totalorder %s30, 1
      %p158 = por %p156, %p157
      %p160 = scmp.ne.s32.totalorder %s145, %s159
      %p161 = scmp.eq.s32.totalorder %s30, 0
      %p162 = por %p160, %p161
      %s164 = sadd.s32 %s163, 1
      %p167 = scmp.eq.s32.totalorder %s24, 1
      %p168 = scmp.ne.s32.totalorder %s163, %s165
      %p169 = scmp.eq.s32.totalorder %s24, 0
      %p170 = por %p168, %p169
      %p171 = scmp.ne.s32.totalorder %s163, %s165
      %p172 = scmp.eq.s32.totalorder %s29, 1
      %p173 = por %p171, %p172
      %p174 = scmp.ne.s32.totalorder %s165, %s166
      %p175 = scmp.eq.s32.totalorder %s29, 0
      %p176 = por %p174, %p175
      %p177 = scmp.ne.s32.totalorder %s165, %s166
      %p178 = scmp.eq.s32.totalorder %s30, 1
      %p179 = por %p177, %p178
      %p181 = scmp.ne.s32.totalorder %s166, %s180
      %p182 = scmp.eq.s32.totalorder %s30, 0
      %p183 = por %p181, %p182
      %s185 = sadd.s32 %s184, 1
      %p188 = scmp.eq.s32.totalorder %s24, 1
      %p189 = scmp.ne.s32.totalorder %s184, %s186
      %p190 = scmp.eq.s32.totalorder %s24, 0
      %p191 = por %p189, %p190
      %p192 = scmp.ne.s32.totalorder %s184, %s186
      %p193 = scmp.eq.s32.totalorder %s29, 1
      %p194 = por %p192, %p193
      %p195 = scmp.ne.s32.totalorder %s186, %s187
      %p196 = scmp.eq.s32.totalorder %s29, 0
      %p197 = por %p195, %p196
      %p198 = scmp.ne.s32.totalorder %s186, %s187
      %p199 = scmp.eq.s32.totalorder %s30, 1
      %p200 = por %p198, %p199
      %p202 = scmp.ne.s32.totalorder %s187, %s201
      %p203 = scmp.eq.s32.totalorder %s30, 0
      %p204 = por %p202, %p203
      %s205 = ssub.s32 %s24, %s31
      %p206 = scmp.eq.s32.totalorder %s205, 0
      %s208 = sadd.s32 %s207, 1
      %s209 = scalar_select %p206, %s207, %s208
      %p212 = pneg %p206
      %p213 = scmp.eq.s32.totalorder %s24, 1
      %p214 = por %p212, %p213
      %p215 = scmp.ne.s32.totalorder %s207, %s210
      %p216 = scmp.eq.s32.totalorder %s24, 0
      %p217 = por %p215, %p216
      %p218 = scmp.ne.s32.totalorder %s207, %s210
      %p219 = scmp.eq.s32.totalorder %s29, 1
      %p220 = por %p218, %p219
      %p221 = scmp.ne.s32.totalorder %s210, %s211
      %p222 = scmp.eq.s32.totalorder %s29, 0
      %p223 = por %p221, %p222
      %p224 = scmp.ne.s32.totalorder %s210, %s211
      %p225 = scmp.eq.s32.totalorder %s30, 1
      %p226 = por %p224, %p225
      %p228 = scmp.ne.s32.totalorder %s211, %s227
      %p229 = scmp.eq.s32.totalorder %s30, 0
      %p230 = por %p228, %p229
      %s231 = ssub.s32 %s24, %s31
      %p232 = scmp.eq.s32.totalorder %s231, 0
      %s234 = sadd.s32 %s233, 1
      %s235 = scalar_select %p232, %s233, %s234
      %p238 = pneg %p232
      %p239 = scmp.eq.s32.totalorder %s24, 1
      %p240 = por %p238, %p239
      %p241 = scmp.ne.s32.totalorder %s233, %s236
      %p242 = scmp.eq.s32.totalorder %s24, 0
      %p243 = por %p241, %p242
      %p244 = scmp.ne.s32.totalorder %s233, %s236
      %p245 = scmp.eq.s32.totalorder %s29, 1
      %p246 = por %p244, %p245
      %p247 = scmp.ne.s32.totalorder %s236, %s237
      %p248 = scmp.eq.s32.totalorder %s29, 0
      %p249 = por %p247, %p248
      %p250 = scmp.ne.s32.totalorder %s236, %s237
      %p251 = scmp.eq.s32.totalorder %s30, 1
      %p252 = por %p250, %p251
      %p254 = scmp.ne.s32.totalorder %s237, %s253
      %p255 = scmp.eq.s32.totalorder %s30, 0
      %p256 = por %p254, %p255
      %s257 = ssub.s32 %s24, %s31
      %p258 = scmp.eq.s32.totalorder %s257, 0
      %s260 = sadd.s32 %s259, 1
      %s261 = scalar_select %p258, %s259, %s260
      %p264 = pneg %p258
      %p265 = scmp.eq.s32.totalorder %s24, 1
      %p266 = por %p264, %p265
      %p267 = scmp.ne.s32.totalorder %s259, %s262
      %p268 = scmp.eq.s32.totalorder %s24, 0
      %p269 = por %p267, %p268
      %p270 = scmp.ne.s32.totalorder %s259, %s262
      %p271 = scmp.eq.s32.totalorder %s29, 1
      %p272 = por %p270, %p271
      %p273 = scmp.ne.s32.totalorder %s262, %s263
      %p274 = scmp.eq.s32.totalorder %s29, 0
      %p275 = por %p273, %p274
      %p276 = scmp.ne.s32.totalorder %s262, %s263
      %p277 = scmp.eq.s32.totalorder %s30, 1
      %p278 = por %p276, %p277
      %p280 = scmp.ne.s32.totalorder %s263, %s279
      %p281 = scmp.eq.s32.totalorder %s30, 0
      %p282 = por %p280, %p281
      %p283 = scmp.le.s32.totalorder 1, %s24
      %p284 = scmp.lt.s32.totalorder %s24, 3
      %p285 = pnand %p283, %p284
      %p286 = pneg %p285
      // Predicated region
      $region9: #{tpu_custom_call.1} parent=5 // pred_check
        _
      $region10: #{tpu_custom_call.1} parent=5 // pred_check_branch
        %288 = sbr.rel (%p285) target = $region12
      $region11: #{tpu_custom_call.1} parent=5 // pred_region
        %s289 = ssub.s32 %s24, 1
        // Predicated region
        $region13: #{tpu_custom_call.1} parent=11 // pred_check
          %p290 = pneg %p71
        $region14: #{tpu_custom_call.1} parent=11 // pred_check_branch
          %292 = sbr.rel (%p290) target = $region16
        $region15: #{tpu_custom_call.1} parent=11 // pred_region
          %s294 = ssub.s32 256, 256
          %295 = vsyncadd [#allocation6], %s294
          %s296 = sshll.u32 [#allocation5], 4
          %s297 = int_to_ptr.vmem [resolvable:$true] %s296
          %302 = dma.hbm_to_vmem [thread:$0]  %s1, 256, %s297, [#allocation6], 128, 128, 8
        $region16: #{tpu_custom_call.1} parent=11 // pred_fallthru
          _
        // Predicated region
        $region17: #{tpu_custom_call.1} parent=11 // pred_check
          %p303 = pneg %p92
        $region18: #{tpu_custom_call.1} parent=11 // pred_check_branch
          %305 = sbr.rel (%p303) target = $region20
        $region19: #{tpu_custom_call.1} parent=11 // pred_region
          %s307 = ssub.s32 512, 512
          %308 = vsyncadd [#allocation6], %s307
          %s309 = sshll.u32 [#allocation7], 4
          %s310 = int_to_ptr.vmem [resolvable:$true] %s309
          %315 = dma.hbm_to_vmem [thread:$0]  %s2, 512, %s310, [#allocation6], 128, 128, 8
        $region20: #{tpu_custom_call.1} parent=11 // pred_fallthru
          _
        // Predicated region
        $region21: #{tpu_custom_call.1} parent=11 // pred_check
          %p316 = pneg %p113
        $region22: #{tpu_custom_call.1} parent=11 // pred_check_branch
          %318 = sbr.rel (%p316) target = $region24
        $region23: #{tpu_custom_call.1} parent=11 // pred_region
          _
        $region24: #{tpu_custom_call.1} parent=11 // pred_fallthru
          _
        // Predicated region
        $region25: #{tpu_custom_call.1} parent=11 // pred_check
          %p319 = pneg %p134
        $region26: #{tpu_custom_call.1} parent=11 // pred_check_branch
          %321 = sbr.rel (%p319) target = $region28
        $region27: #{tpu_custom_call.1} parent=11 // pred_region
          %s323 = ssub.s32 512, 512
          %324 = vsyncadd [#allocation9], %s323
          %s325 = sshll.u32 [#allocation8], 4
          %s326 = int_to_ptr.vmem [resolvable:$true] %s325
          %331 = dma.hbm_to_vmem [thread:$0]  %s4, 512, %s326, [#allocation9], 128, 128, 8
        $region28: #{tpu_custom_call.1} parent=11 // pred_fallthru
          _
        // Predicated region
        $region29: #{tpu_custom_call.1} parent=11 // pred_check
          %p332 = pneg %p155
        $region30: #{tpu_custom_call.1} parent=11 // pred_check_branch
          %334 = sbr.rel (%p332) target = $region32
        $region31: #{tpu_custom_call.1} parent=11 // pred_region
          _
        $region32: #{tpu_custom_call.1} parent=11 // pred_fallthru
          _
        // Predicated region
        $region33: #{tpu_custom_call.1} parent=11 // pred_check
          %p335 = pneg %p176
        $region34: #{tpu_custom_call.1} parent=11 // pred_check_branch
          %337 = sbr.rel (%p335) target = $region36
        $region35: #{tpu_custom_call.1} parent=11 // pred_region
          %s339 = ssub.s32 512, 512
          %340 = vsyncadd [#allocation9], %s339
          %s341 = sshll.u32 [#allocation10], 4
          %s342 = int_to_ptr.vmem [resolvable:$true] %s341
          %347 = dma.hbm_to_vmem [thread:$0]  %s6, 512, %s342, [#allocation9], 128, 128, 8
        $region36: #{tpu_custom_call.1} parent=11 // pred_fallthru
          _
        // Predicated region
        $region37: #{tpu_custom_call.1} parent=11 // pred_check
          %p348 = pneg %p197
        $region38: #{tpu_custom_call.1} parent=11 // pred_check_branch
          %350 = sbr.rel (%p348) target = $region40
        $region39: #{tpu_custom_call.1} parent=11 // pred_region
          _
        $region40: #{tpu_custom_call.1} parent=11 // pred_fallthru
          _
      $region12: #{tpu_custom_call.1} parent=5 // pred_fallthru
        _
      %p351 = scmp.lt.s32.totalorder %s24, 2
      // Predicated region
      $region41: #{tpu_custom_call.1} parent=5 // pred_check
        %p352 = pneg %p351
      $region42: #{tpu_custom_call.1} parent=5 // pred_check_branch
        %354 = sbr.rel (%p352) target = $region44
      $region43: #{tpu_custom_call.1} parent=5 // pred_region
        // Predicated region
        $region45: #{tpu_custom_call.1} parent=43 // pred_check
          %p355 = pneg %p44
        $region46: #{tpu_custom_call.1} parent=43 // pred_check_branch
          %357 = sbr.rel (%p355) target = $region48
        $region47: #{tpu_custom_call.1} parent=43 // pred_region
          %s358 = sand.u32 %s34, 1
          %s359 = scalar_lea.sflag [#allocation3], %s358
          %s360 = sand.u32 %s34, 1
          %s361 = smul.addr %s360, 8
          %s362 = scalar_lea.vmem [#allocation2], %s361
          %s364 = ssub.s32 128, 128
          %365 = vsyncadd %s359, %s364
          %s366 = smul.addr %s24, 128
          %s367 = scalar_lea.hbm %s0, %s366
          %s369 = sshll.u32 %s362, 4
          %s370 = int_to_ptr.vmem [resolvable:$true] %s369
          %372 = dma.hbm_to_vmem [thread:$0]  %s367, 128, %s370, %s359
        $region48: #{tpu_custom_call.1} parent=43 // pred_fallthru
          _
        // Predicated region
        $region49: #{tpu_custom_call.1} parent=43 // pred_check
          %p373 = pneg %p217
        $region50: #{tpu_custom_call.1} parent=43 // pred_check_branch
          %375 = sbr.rel (%p373) target = $region52
        $region51: #{tpu_custom_call.1} parent=43 // pred_region
          %p376 = scmp.lt.s32.totalorder %s24, 1
          %s377 = scalar_select %p376, %s24, 1
          %s378 = smul.addr %s377, 4
          %s379 = scalar_lea.vmem %s8, %s378
        $region52: #{tpu_custom_call.1} parent=43 // pred_fallthru
          _
        // Predicated region
        $region53: #{tpu_custom_call.1} parent=43 // pred_check
          %p380 = pneg %p243
        $region54: #{tpu_custom_call.1} parent=43 // pred_check_branch
          %382 = sbr.rel (%p380) target = $region56
        $region55: #{tpu_custom_call.1} parent=43 // pred_region
          %p383 = scmp.lt.s32.totalorder %s24, 1
          %s384 = scalar_select %p383, %s24, 1
          %s385 = smul.addr %s384, 8
          %s386 = scalar_lea.vmem %s9, %s385
        $region56: #{tpu_custom_call.1} parent=43 // pred_fallthru
          _
      $region44: #{tpu_custom_call.1} parent=5 // pred_fallthru
        _
      %p387 = scmp.le.s32.totalorder 1, %s24
      %p388 = scmp.lt.s32.totalorder %s24, 3
      %p389 = pnand %p387, %p388
      %p390 = pneg %p389
      // Predicated region
      $region57: #{tpu_custom_call.1} parent=5 // pred_check
        _
      $region58: #{tpu_custom_call.1} parent=5 // pred_check_branch
        %392 = sbr.rel (%p389) target = $region60
      $region59: #{tpu_custom_call.1} parent=5 // pred_region
        %s393 = ssub.s32 %s24, 1
        %s394 = sand.u32 %s37, 1
        %s395 = scalar_lea.sflag [#allocation3], %s394
        %s396 = sand.u32 %s37, 1
        %s397 = smul.addr %s396, 8
        %s398 = scalar_lea.vmem [#allocation2], %s397
        // Predicated region
        $region61: #{tpu_custom_call.1} parent=59 // pred_check
          %p399 = pneg %p50
        $region62: #{tpu_custom_call.1} parent=59 // pred_check_branch
          %401 = sbr.rel (%p399) target = $region64
        $region63: #{tpu_custom_call.1} parent=59 // pred_region
          %402 = dma.done %s395, 128
        $region64: #{tpu_custom_call.1} parent=59 // pred_fallthru
          _
        // Predicated region
        $region65: #{tpu_custom_call.1} parent=59 // pred_check
          %p403 = pneg %p71
        $region66: #{tpu_custom_call.1} parent=59 // pred_check_branch
          %405 = sbr.rel (%p403) target = $region68
        $region67: #{tpu_custom_call.1} parent=59 // pred_region
          %406 = dma.done [#allocation6], 256
        $region68: #{tpu_custom_call.1} parent=59 // pred_fallthru
          _
        // Predicated region
        $region69: #{tpu_custom_call.1} parent=59 // pred_check
          %p407 = pneg %p92
        $region70: #{tpu_custom_call.1} parent=59 // pred_check_branch
          %409 = sbr.rel (%p407) target = $region72
        $region71: #{tpu_custom_call.1} parent=59 // pred_region
          %410 = dma.done [#allocation6], 512
        $region72: #{tpu_custom_call.1} parent=59 // pred_fallthru
          _
        // Predicated region
        $region73: #{tpu_custom_call.1} parent=59 // pred_check
          %p411 = pneg %p134
        $region74: #{tpu_custom_call.1} parent=59 // pred_check_branch
          %413 = sbr.rel (%p411) target = $region76
        $region75: #{tpu_custom_call.1} parent=59 // pred_region
          %414 = dma.done [#allocation9], 512
        $region76: #{tpu_custom_call.1} parent=59 // pred_fallthru
          _
        // Predicated region
        $region77: #{tpu_custom_call.1} parent=59 // pred_check
          %p415 = pneg %p176
        $region78: #{tpu_custom_call.1} parent=59 // pred_check_branch
          %417 = sbr.rel (%p415) target = $region80
        $region79: #{tpu_custom_call.1} parent=59 // pred_region
          %418 = dma.done [#allocation9], 512
        $region80: #{tpu_custom_call.1} parent=59 // pred_fallthru
          _
        %s419 = sand.u32 %s37, 1
        %s420 = scalar_lea.sflag [#allocation3], %s419
        %s421 = sand.u32 %s37, 1
        %s422 = smul.addr %s421, 8
        %s423 = scalar_lea.vmem [#allocation2], %s422
        %p424 = pneg %p50
        %p425 = pneg %p47
        %p426 = pneg %p71
        %p427 = pneg %p68
        %p428 = pneg %p92
        %p429 = pneg %p89
        %p430 = pneg %p113
        %p431 = pneg %p110
        %p432 = pneg %p134
        %p433 = pneg %p131
        %p434 = pneg %p155
        %p435 = pneg %p152
        %p436 = pneg %p176
        %p437 = pneg %p173
        %p438 = pneg %p197
        %p439 = pneg %p194
        %p440 = scmp.lt.s32.totalorder %s29, 1
        %s441 = scalar_select %p440, %s29, 1
        %s442 = smul.addr %s441, 4
        %s443 = scalar_lea.vmem %s8, %s442
        %p444 = pneg %p223
        %p445 = pneg %p220
        %p446 = scmp.lt.s32.totalorder %s29, 1
        %s447 = scalar_select %p446, %s29, 1
        %s448 = smul.addr %s447, 8
        %s449 = scalar_lea.vmem %s9, %s448
        %p450 = pneg %p249
        %p451 = pneg %p246
        %p452 = pneg %p275
        %p453 = pneg %p272
        %s454 = sand.u32 %s262, 1
        %s455 = scalar_lea.sflag [#allocation4], %s454
        %s456 = sand.u32 %s262, 1
        %s457 = smul.addr %s456, 8
        %s458 = scalar_lea.vmem [#allocation11], %s457
        %p459 = scmp.lt.s32.totalorder %s29, 1
        %s460 = scalar_select %p459, %s29, 1
        %s461 = smul.addr %s460, 4
        %s462 = scalar_lea.vmem %s8, %s461
        %p463 = scmp.lt.s32.totalorder %s29, 1
        %s464 = scalar_select %p463, %s29, 1
        %s465 = smul.addr %s464, 8
        %s466 = scalar_lea.vmem %s9, %s465
        %v467 = vld [vmem:[%s398] sm:$0xff]
        %v468 = vld [vmem:[#allocation5] sm:$0xff]
        %v469 = vld [vmem:[#allocation5 + $0x8] sm:$0xff]
        %v470 = vld [vmem:[#allocation7] sm:$0xff]
        %v471 = vld [vmem:[#allocation7 + $0x8] sm:$0xff]
        %v472 = vld [vmem:[#allocation7 + $0x10] sm:$0xff]
        %v473 = vld [vmem:[#allocation7 + $0x18] sm:$0xff]
        %v474 = vld [vmem:[%s3] sm:$0x1]
        %v476 = vlaneseq
        %v477 = vshrl.u32 %v476, 7
        %v478 = vsub.s32 0, %v477
        %v479 = vrot.slane %v474, %v478
        %vm481 = vcmask 261120
        %v483 = vsel %vm481, %v467, 0
        %485 = vmatprep.subr.mxu0 0.0
        %486 = vmatpush1.msra.mxu0 %v470
        %487 = vmatprep.subr.mxu0 0.0
        %488 = vmatpush1.msra.mxu0 %v471
        %489 = vmatprep.subr.mxu0 0.0
        %490 = vmatpush1.msra.mxu0 %v472
        %491 = vmatprep.subr.mxu0 0.0
        %492 = vmatpush1.msra.mxu0 %v473
        %493 = vmatprep.subr.mxu0 0.0
        %494 = vmatpush1.msra.mxu0 0.0
        %495 = vmatprep.subr.mxu0 0.0
        %496 = vmatpush1.msra.mxu0 0.0
        %497 = vmatprep.subr.mxu0 0.0
        %498 = vmatpush1.msra.mxu0 0.0
        %499 = vmatprep.subr.mxu0 0.0
        %500 = vmatpush1.msra.mxu0 0.0
        %501 = vmatprep.subr.mxu0 0.0
        %502 = vmatpush1.msra.mxu0 0.0
        %503 = vmatprep.subr.mxu0 0.0
        %504 = vmatpush1.msra.mxu0 0.0
        %505 = vmatprep.subr.mxu0 0.0
        %506 = vmatpush1.msra.mxu0 0.0
        %507 = vmatprep.subr.mxu0 0.0
        %508 = vmatpush1.msra.mxu0 0.0
        %509 = vmatprep.subr.mxu0 0.0
        %510 = vmatpush1.msra.mxu0 0.0
        %511 = vmatprep.subr.mxu0 0.0
        %512 = vmatpush1.msra.mxu0 0.0
        %513 = vmatprep.subr.mxu0 0.0
        %514 = vmatpush1.msra.mxu0 0.0
        %515 = vmatprep.subr.mxu0 0.0
        %516 = vmatpush1.msra.mxu0 0.0
        %517 = vmatprep.subr.mxu0 0.0
        %518 = vmatpush1.msra.mxu0 0.0
        %519 = vmatprep.subr.mxu0 0.0
        %520 = vmatpush1.msra.mxu0 0.0
        %521 = vmatprep.subr.mxu0 0.0
        %522 = vmatpush1.msra.mxu0 0.0
        %523 = vmatprep.subr.mxu0 0.0
        %524 = vmatpush1.msra.mxu0 0.0
        %525 = vmatprep.subr.mxu0 0.0
        %526 = vmatpush1.msra.mxu0 0.0
        %527 = vmatprep.subr.mxu0 0.0
        %528 = vmatpush1.msra.mxu0 0.0
        %529 = vmatprep.subr.mxu0 0.0
        %530 = vmatpush1.msra.mxu0 0.0
        %531 = vmatprep.subr.mxu0 0.0
        %532 = vmatpush1.msra.mxu0 0.0
        %533 = vmatprep.subr.mxu0 0.0
        %534 = vmatpush1.msra.mxu0 0.0
        %535 = vmatprep.subr.mxu0 0.0
        %536 = vmatpush1.msra.mxu0 0.0
        %537 = vmatprep.subr.mxu0 0.0
        %538 = vmatpush1.msra.mxu0 0.0
        %539 = vmatprep.subr.mxu0 0.0
        %540 = vmatpush1.msra.mxu0 0.0
        %541 = vmatprep.subr.mxu0 0.0
        %542 = vmatpush1.msra.mxu0 0.0
        %543 = vmatprep.subr.mxu0 0.0
        %544 = vmatpush1.msra.mxu0 0.0
        %545 = vmatprep.subr.mxu0 0.0
        %546 = vmatpush1.msra.mxu0 0.0
        %547 = vmatprep.subr.mxu0 0.0
        %548 = vmatpush1.msra.mxu0 0.0
        %549 = vmatprep.mubr.f32.mxu0 0.0
        %550 = vmatmul.mubr.f32.gmra.mrb[0].mxu0 %v483
        %v551 = vpop.f32.mrb[0].mxu0
        %v552 = vadd.f32 %v479, %v551
        %v553 = vpop.f32.mrb[0].mxu0
        %554 = vdwg.mxu0
        %v555 = vld [vmem:[#allocation8] sm:$0xff]
        %v556 = vld [vmem:[#allocation8 + $0x8] sm:$0xff]
        %v557 = vld [vmem:[#allocation8 + $0x10] sm:$0xff]
        %v558 = vld [vmem:[#allocation8 + $0x18] sm:$0xff]
        %v559 = vld [vmem:[%s5] sm:$0x1]
        %v561 = vlaneseq
        %v562 = vshrl.u32 %v561, 7
        %v563 = vsub.s32 0, %v562
        %v564 = vrot.slane %v559, %v563
        %v567 = vsel %vm481, %v468, 0
        %v570 = vsel %vm481, %v469, 0
        %572 = vmatprep.subr.mxu0 0.0
        %573 = vmatpush1.msra.mxu0 %v555
        %574 = vmatprep.subr.mxu0 0.0
        %575 = vmatpush1.msra.mxu0 %v556
        %576 = vmatprep.subr.mxu0 0.0
        %577 = vmatpush1.msra.mxu0 %v557
        %578 = vmatprep.subr.mxu0 0.0
        %579 = vmatpush1.msra.mxu0 %v558
        %580 = vmatprep.subr.mxu0 0.0
        %581 = vmatpush1.msra.mxu0 0.0
        %582 = vmatprep.subr.mxu0 0.0
        %583 = vmatpush1.msra.mxu0 0.0
        %584 = vmatprep.subr.mxu0 0.0
        %585 = vmatpush1.msra.mxu0 0.0
        %586 = vmatprep.subr.mxu0 0.0
        %587 = vmatpush1.msra.mxu0 0.0
        %588 = vmatprep.subr.mxu0 0.0
        %589 = vmatpush1.msra.mxu0 0.0
        %590 = vmatprep.subr.mxu0 0.0
        %591 = vmatpush1.msra.mxu0 0.0
        %592 = vmatprep.subr.mxu0 0.0
        %593 = vmatpush1.msra.mxu0 0.0
        %594 = vmatprep.subr.mxu0 0.0
        %595 = vmatpush1.msra.mxu0 0.0
        %596 = vmatprep.subr.mxu0 0.0
        %597 = vmatpush1.msra.mxu0 0.0
        %598 = vmatprep.subr.mxu0 0.0
        %599 = vmatpush1.msra.mxu0 0.0
        %600 = vmatprep.subr.mxu0 0.0
        %601 = vmatpush1.msra.mxu0 0.0
        %602 = vmatprep.subr.mxu0 0.0
        %603 = vmatpush1.msra.mxu0 0.0
        %604 = vmatprep.subr.mxu0 0.0
        %605 = vmatpush1.msra.mxu0 0.0
        %606 = vmatprep.subr.mxu0 0.0
        %607 = vmatpush1.msra.mxu0 0.0
        %608 = vmatprep.subr.mxu0 0.0
        %609 = vmatpush1.msra.mxu0 0.0
        %610 = vmatprep.subr.mxu0 0.0
        %611 = vmatpush1.msra.mxu0 0.0
        %612 = vmatprep.subr.mxu0 0.0
        %613 = vmatpush1.msra.mxu0 0.0
        %614 = vmatprep.subr.mxu0 0.0
        %615 = vmatpush1.msra.mxu0 0.0
        %616 = vmatprep.subr.mxu0 0.0
        %617 = vmatpush1.msra.mxu0 0.0
        %618 = vmatprep.subr.mxu0 0.0
        %619 = vmatpush1.msra.mxu0 0.0
        %620 = vmatprep.subr.mxu0 0.0
        %621 = vmatpush1.msra.mxu0 0.0
        %622 = vmatprep.subr.mxu0 0.0
        %623 = vmatpush1.msra.mxu0 0.0
        %624 = vmatprep.subr.mxu0 0.0
        %625 = vmatpush1.msra.mxu0 0.0
        %626 = vmatprep.subr.mxu0 0.0
        %627 = vmatpush1.msra.mxu0 0.0
        %628 = vmatprep.subr.mxu0 0.0
        %629 = vmatpush1.msra.mxu0 0.0
        %630 = vmatprep.subr.mxu0 0.0
        %631 = vmatpush1.msra.mxu0 0.0
        %632 = vmatprep.subr.mxu0 0.0
        %633 = vmatpush1.msra.mxu0 0.0
        %634 = vmatprep.subr.mxu0 0.0
        %635 = vmatpush1.msra.mxu0 0.0
        %636 = vmatprep.mubr.f32.mxu0 0.0
        %637 = vmatmul.mubr.f32.gmra.mrb[0].mxu0 %v567
        %v638 = vpop.f32.mrb[0].mxu0
        %v639 = vadd.f32 %v564, %v638
        %v640 = vpop.f32.mrb[0].mxu0
        %641 = vmatprep.mubr.f32.mxu0 0.0
        %642 = vmatmul.mubr.f32.gmra.mrb[0].mxu0 %v570
        %v643 = vpop.f32.mrb[0].mxu0
        %v644 = vadd.f32 %v564, %v643
        %v645 = vpop.f32.mrb[0].mxu0
        %646 = vdwg.mxu0
        %v647 = vld [vmem:[#allocation10] sm:$0xff]
        %v648 = vld [vmem:[#allocation10 + $0x8] sm:$0xff]
        %v649 = vld [vmem:[#allocation10 + $0x10] sm:$0xff]
        %v650 = vld [vmem:[#allocation10 + $0x18] sm:$0xff]
        %v651 = vld [vmem:[%s7] sm:$0x1]
        %v653 = vlaneseq
        %v654 = vshrl.u32 %v653, 7
        %v655 = vsub.s32 0, %v654
        %v656 = vrot.slane %v651, %v655
        %658 = vmatprep.subr.mxu0 0.0
        %659 = vmatpush1.msra.mxu0 %v647
        %660 = vmatprep.subr.mxu0 0.0
        %661 = vmatpush1.msra.mxu0 %v648
        %662 = vmatprep.subr.mxu0 0.0
        %663 = vmatpush1.msra.mxu0 %v649
        %664 = vmatprep.subr.mxu0 0.0
        %665 = vmatpush1.msra.mxu0 %v650
        %666 = vmatprep.subr.mxu0 0.0
        %667 = vmatpush1.msra.mxu0 0.0
        %668 = vmatprep.subr.mxu0 0.0
        %669 = vmatpush1.msra.mxu0 0.0
        %670 = vmatprep.subr.mxu0 0.0
        %671 = vmatpush1.msra.mxu0 0.0
        %672 = vmatprep.subr.mxu0 0.0
        %673 = vmatpush1.msra.mxu0 0.0
        %674 = vmatprep.subr.mxu0 0.0
        %675 = vmatpush1.msra.mxu0 0.0
        %676 = vmatprep.subr.mxu0 0.0
        %677 = vmatpush1.msra.mxu0 0.0
        %678 = vmatprep.subr.mxu0 0.0
        %679 = vmatpush1.msra.mxu0 0.0
        %680 = vmatprep.subr.mxu0 0.0
        %681 = vmatpush1.msra.mxu0 0.0
        %682 = vmatprep.subr.mxu0 0.0
        %683 = vmatpush1.msra.mxu0 0.0
        %684 = vmatprep.subr.mxu0 0.0
        %685 = vmatpush1.msra.mxu0 0.0
        %686 = vmatprep.subr.mxu0 0.0
        %687 = vmatpush1.msra.mxu0 0.0
        %688 = vmatprep.subr.mxu0 0.0
        %689 = vmatpush1.msra.mxu0 0.0
        %690 = vmatprep.subr.mxu0 0.0
        %691 = vmatpush1.msra.mxu0 0.0
        %692 = vmatprep.subr.mxu0 0.0
        %693 = vmatpush1.msra.mxu0 0.0
        %694 = vmatprep.subr.mxu0 0.0
        %695 = vmatpush1.msra.mxu0 0.0
        %696 = vmatprep.subr.mxu0 0.0
        %697 = vmatpush1.msra.mxu0 0.0
        %698 = vmatprep.subr.mxu0 0.0
        %699 = vmatpush1.msra.mxu0 0.0
        %700 = vmatprep.subr.mxu0 0.0
        %701 = vmatpush1.msra.mxu0 0.0
        %702 = vmatprep.subr.mxu0 0.0
        %703 = vmatpush1.msra.mxu0 0.0
        %704 = vmatprep.subr.mxu0 0.0
        %705 = vmatpush1.msra.mxu0 0.0
        %706 = vmatprep.subr.mxu0 0.0
        %707 = vmatpush1.msra.mxu0 0.0
        %708 = vmatprep.subr.mxu0 0.0
        %709 = vmatpush1.msra.mxu0 0.0
        %710 = vmatprep.subr.mxu0 0.0
        %711 = vmatpush1.msra.mxu0 0.0
        %712 = vmatprep.subr.mxu0 0.0
        %713 = vmatpush1.msra.mxu0 0.0
        %714 = vmatprep.subr.mxu0 0.0
        %715 = vmatpush1.msra.mxu0 0.0
        %716 = vmatprep.subr.mxu0 0.0
        %717 = vmatpush1.msra.mxu0 0.0
        %718 = vmatprep.subr.mxu0 0.0
        %719 = vmatpush1.msra.mxu0 0.0
        %720 = vmatprep.subr.mxu0 0.0
        %721 = vmatpush1.msra.mxu0 0.0
        %722 = vmatprep.mubr.f32.mxu0 0.0
        %723 = vmatmul.mubr.f32.gmra.mrb[0].mxu0 %v567
        %v724 = vpop.f32.mrb[0].mxu0
        %v725 = vadd.f32 %v656, %v724
        %v726 = vpop.f32.mrb[0].mxu0
        %727 = vmatprep.mubr.f32.mxu0 0.0
        %728 = vmatmul.mubr.f32.gmra.mrb[0].mxu0 %v570
        %v729 = vpop.f32.mrb[0].mxu0
        %v730 = vadd.f32 %v656, %v729
        %v731 = vpop.f32.mrb[0].mxu0
        %732 = vdwg.mxu0
        %v733 = vld [vmem:[%s462] sm:$0xf]
        %v734 = vunpack.c.l.bf16 %v733
        %v735 = vld [vmem:[%s466] sm:$0xff]
        %vm736 = vcmask 64512
        %v738 = vsel %vm736, %v552, 0
        %v741 = vsel %vm736, %v639, 0
        %v744 = vsel %vm736, %v644, 0
        %746 = vmatprep.subr.mxu0 0.0
        %747 = vmatpush1.xpose.msra.mxu0 %v741
        %748 = vmatprep.subr.mxu0 0.0
        %749 = vmatpush1.xpose.msra.mxu0 %v744
        %750 = vmatprep.subr.mxu0 0.0
        %751 = vmatpush1.xpose.msra.mxu0 0.0
        %752 = vmatprep.subr.mxu0 0.0
        %753 = vmatpush1.xpose.msra.mxu0 0.0
        %754 = vmatprep.subr.mxu0 0.0
        %755 = vmatpush1.xpose.msra.mxu0 0.0
        %756 = vmatprep.subr.mxu0 0.0
        %757 = vmatpush1.xpose.msra.mxu0 0.0
        %758 = vmatprep.subr.mxu0 0.0
        %759 = vmatpush1.xpose.msra.mxu0 0.0
        %760 = vmatprep.subr.mxu0 0.0
        %761 = vmatpush1.xpose.msra.mxu0 0.0
        %762 = vmatprep.subr.mxu0 0.0
        %763 = vmatpush1.xpose.msra.mxu0 0.0
        %764 = vmatprep.subr.mxu0 0.0
        %765 = vmatpush1.xpose.msra.mxu0 0.0
        %766 = vmatprep.subr.mxu0 0.0
        %767 = vmatpush1.xpose.msra.mxu0 0.0
        %768 = vmatprep.subr.mxu0 0.0
        %769 = vmatpush1.xpose.msra.mxu0 0.0
        %770 = vmatprep.subr.mxu0 0.0
        %771 = vmatpush1.xpose.msra.mxu0 0.0
        %772 = vmatprep.subr.mxu0 0.0
        %773 = vmatpush1.xpose.msra.mxu0 0.0
        %774 = vmatprep.subr.mxu0 0.0
        %775 = vmatpush1.xpose.msra.mxu0 0.0
        %776 = vmatprep.subr.mxu0 0.0
        %777 = vmatpush1.xpose.msra.mxu0 0.0
        %778 = vmatprep.subr.mxu0 0.0
        %779 = vmatpush1.xpose.msra.mxu0 0.0
        %780 = vmatprep.subr.mxu0 0.0
        %781 = vmatpush1.xpose.msra.mxu0 0.0
        %782 = vmatprep.subr.mxu0 0.0
        %783 = vmatpush1.xpose.msra.mxu0 0.0
        %784 = vmatprep.subr.mxu0 0.0
        %785 = vmatpush1.xpose.msra.mxu0 0.0
        %786 = vmatprep.subr.mxu0 0.0
        %787 = vmatpush1.xpose.msra.mxu0 0.0
        %788 = vmatprep.subr.mxu0 0.0
        %789 = vmatpush1.xpose.msra.mxu0 0.0
        %790 = vmatprep.subr.mxu0 0.0
        %791 = vmatpush1.xpose.msra.mxu0 0.0
        %792 = vmatprep.subr.mxu0 0.0
        %793 = vmatpush1.xpose.msra.mxu0 0.0
        %794 = vmatprep.subr.mxu0 0.0
        %795 = vmatpush1.xpose.msra.mxu0 0.0
        %796 = vmatprep.subr.mxu0 0.0
        %797 = vmatpush1.xpose.msra.mxu0 0.0
        %798 = vmatprep.subr.mxu0 0.0
        %799 = vmatpush1.xpose.msra.mxu0 0.0
        %800 = vmatprep.subr.mxu0 0.0
        %801 = vmatpush1.xpose.msra.mxu0 0.0
        %802 = vmatprep.subr.mxu0 0.0
        %803 = vmatpush1.xpose.msra.mxu0 0.0
        %804 = vmatprep.subr.mxu0 0.0
        %805 = vmatpush1.xpose.msra.mxu0 0.0
        %806 = vmatprep.subr.mxu0 0.0
        %807 = vmatpush1.xpose.msra.mxu0 0.0
        %808 = vmatprep.subr.mxu0 0.0
        %809 = vmatpush1.xpose.msra.mxu0 0.0
        %810 = vmatprep.mubr.f32.mxu0 0.0
        %811 = vmatmul.mubr.f32.gmra.mrb[0].mxu0 %v738
        %v812 = vpop.f32.mrb[0].mxu0
        %v813 = vadd.f32 0.0, %v812
        %v814 = vpop.f32.mrb[0].mxu0
        %815 = vdwg.mxu0
        %v816 = vmul.f32 %v813, 0.35355338
        %v817 = vadd.f32 %v816, %v735
        %v818 = vmax.f32 %v817, -5.0
        %v819 = vmin.f32 %v818, 5.0
        %v820 = vmul.f32 %v819, 1.442695
        %v821 = vpow.pop %v820
        %v822 = vmul.f32 %v821, %v734
        %vm823 = vcmask 130048
        %v824 = vsel %vm823, %v822, 0.0
        %825 = vadd.xlane.f32.xlu0 %v824
        %v826 = vpop.xlane.xlu0 %825
        %v828 = vsel %vm823, %v822, 0
        %830 = vmatprep.subr.mxu0 0.0
        %831 = vmatpush1.msra.mxu0 %v725
        %832 = vmatprep.subr.mxu0 0.0
        %833 = vmatpush1.msra.mxu0 %v730
        %834 = vmatprep.subr.mxu0 0.0
        %835 = vmatpush1.msra.mxu0 0.0
        %836 = vmatprep.subr.mxu0 0.0
        %837 = vmatpush1.msra.mxu0 0.0
        %838 = vmatprep.subr.mxu0 0.0
        %839 = vmatpush1.msra.mxu0 0.0
        %840 = vmatprep.subr.mxu0 0.0
        %841 = vmatpush1.msra.mxu0 0.0
        %842 = vmatprep.subr.mxu0 0.0
        %843 = vmatpush1.msra.mxu0 0.0
        %844 = vmatprep.subr.mxu0 0.0
        %845 = vmatpush1.msra.mxu0 0.0
        %846 = vmatprep.subr.mxu0 0.0
        %847 = vmatpush1.msra.mxu0 0.0
        %848 = vmatprep.subr.mxu0 0.0
        %849 = vmatpush1.msra.mxu0 0.0
        %850 = vmatprep.subr.mxu0 0.0
        %851 = vmatpush1.msra.mxu0 0.0
        %852 = vmatprep.subr.mxu0 0.0
        %853 = vmatpush1.msra.mxu0 0.0
        %854 = vmatprep.subr.mxu0 0.0
        %855 = vmatpush1.msra.mxu0 0.0
        %856 = vmatprep.subr.mxu0 0.0
        %857 = vmatpush1.msra.mxu0 0.0
        %858 = vmatprep.subr.mxu0 0.0
        %859 = vmatpush1.msra.mxu0 0.0
        %860 = vmatprep.subr.mxu0 0.0
        %861 = vmatpush1.msra.mxu0 0.0
        %862 = vmatprep.subr.mxu0 0.0
        %863 = vmatpush1.msra.mxu0 0.0
        %864 = vmatprep.subr.mxu0 0.0
        %865 = vmatpush1.msra.mxu0 0.0
        %866 = vmatprep.subr.mxu0 0.0
        %867 = vmatpush1.msra.mxu0 0.0
        %868 = vmatprep.subr.mxu0 0.0
        %869 = vmatpush1.msra.mxu0 0.0
        %870 = vmatprep.subr.mxu0 0.0
        %871 = vmatpush1.msra.mxu0 0.0
        %872 = vmatprep.subr.mxu0 0.0
        %873 = vmatpush1.msra.mxu0 0.0
        %874 = vmatprep.subr.mxu0 0.0
        %875 = vmatpush1.msra.mxu0 0.0
        %876 = vmatprep.subr.mxu0 0.0
        %877 = vmatpush1.msra.mxu0 0.0
        %878 = vmatprep.subr.mxu0 0.0
        %879 = vmatpush1.msra.mxu0 0.0
        %880 = vmatprep.subr.mxu0 0.0
        %881 = vmatpush1.msra.mxu0 0.0
        %882 = vmatprep.subr.mxu0 0.0
        %883 = vmatpush1.msra.mxu0 0.0
        %884 = vmatprep.subr.mxu0 0.0
        %885 = vmatpush1.msra.mxu0 0.0
        %886 = vmatprep.subr.mxu0 0.0
        %887 = vmatpush1.msra.mxu0 0.0
        %888 = vmatprep.subr.mxu0 0.0
        %889 = vmatpush1.msra.mxu0 0.0
        %890 = vmatprep.subr.mxu0 0.0
        %891 = vmatpush1.msra.mxu0 0.0
        %892 = vmatprep.subr.mxu0 0.0
        %893 = vmatpush1.msra.mxu0 0.0
        %894 = vmatprep.mubr.f32.mxu0 0.0
        %895 = vmatmul.mubr.f32.gmra.mrb[0].mxu0 %v828
        %v896 = vpop.f32.mrb[0].mxu0
        %v897 = vadd.f32 0.0, %v896
        %v898 = vpop.f32.mrb[0].mxu0
        %899 = vdwg.mxu0
        %v900 = vadd.f32 %v826, 1e-06
        %v901 = vrcp.pop %v900
        %v902 = vmul.f32 %v897, %v901
        %903 = vrot.lane.b32.xlu0 %v552, 120
        %v904 = vpop.permute.xlu0 %903
        %905 = vrot.lane.b32.xlu0 %v639, 120
        %v906 = vpop.permute.xlu0 %905
        %907 = vrot.lane.b32.xlu0 %v644, 120
        %v908 = vpop.permute.xlu0 %907
        %v909 = vsel %vm736, %v904, 0
        %v911 = vsel %vm736, %v906, 0
        %v913 = vsel %vm736, %v908, 0
        %915 = vmatprep.subr.mxu0 0.0
        %916 = vmatpush1.xpose.msra.mxu0 %v911
        %917 = vmatprep.subr.mxu0 0.0
        %918 = vmatpush1.xpose.msra.mxu0 %v913
        %919 = vmatprep.subr.mxu0 0.0
        %920 = vmatpush1.xpose.msra.mxu0 0.0
        %921 = vmatprep.subr.mxu0 0.0
        %922 = vmatpush1.xpose.msra.mxu0 0.0
        %923 = vmatprep.subr.mxu0 0.0
        %924 = vmatpush1.xpose.msra.mxu0 0.0
        %925 = vmatprep.subr.mxu0 0.0
        %926 = vmatpush1.xpose.msra.mxu0 0.0
        %927 = vmatprep.subr.mxu0 0.0
        %928 = vmatpush1.xpose.msra.mxu0 0.0
        %929 = vmatprep.subr.mxu0 0.0
        %930 = vmatpush1.xpose.msra.mxu0 0.0
        %931 = vmatprep.subr.mxu0 0.0
        %932 = vmatpush1.xpose.msra.mxu0 0.0
        %933 = vmatprep.subr.mxu0 0.0
        %934 = vmatpush1.xpose.msra.mxu0 0.0
        %935 = vmatprep.subr.mxu0 0.0
        %936 = vmatpush1.xpose.msra.mxu0 0.0
        %937 = vmatprep.subr.mxu0 0.0
        %938 = vmatpush1.xpose.msra.mxu0 0.0
        %939 = vmatprep.subr.mxu0 0.0
        %940 = vmatpush1.xpose.msra.mxu0 0.0
        %941 = vmatprep.subr.mxu0 0.0
        %942 = vmatpush1.xpose.msra.mxu0 0.0
        %943 = vmatprep.subr.mxu0 0.0
        %944 = vmatpush1.xpose.msra.mxu0 0.0
        %945 = vmatprep.subr.mxu0 0.0
        %946 = vmatpush1.xpose.msra.mxu0 0.0
        %947 = vmatprep.subr.mxu0 0.0
        %948 = vmatpush1.xpose.msra.mxu0 0.0
        %949 = vmatprep.subr.mxu0 0.0
        %950 = vmatpush1.xpose.msra.mxu0 0.0
        %951 = vmatprep.subr.mxu0 0.0
        %952 = vmatpush1.xpose.msra.mxu0 0.0
        %953 = vmatprep.subr.mxu0 0.0
        %954 = vmatpush1.xpose.msra.mxu0 0.0
        %955 = vmatprep.subr.mxu0 0.0
        %956 = vmatpush1.xpose.msra.mxu0 0.0
        %957 = vmatprep.subr.mxu0 0.0
        %958 = vmatpush1.xpose.msra.mxu0 0.0
        %959 = vmatprep.subr.mxu0 0.0
        %960 = vmatpush1.xpose.msra.mxu0 0.0
        %961 = vmatprep.subr.mxu0 0.0
        %962 = vmatpush1.xpose.msra.mxu0 0.0
        %963 = vmatprep.subr.mxu0 0.0
        %964 = vmatpush1.xpose.msra.mxu0 0.0
        %965 = vmatprep.subr.mxu0 0.0
        %966 = vmatpush1.xpose.msra.mxu0 0.0
        %967 = vmatprep.subr.mxu0 0.0
        %968 = vmatpush1.xpose.msra.mxu0 0.0
        %969 = vmatprep.subr.mxu0 0.0
        %970 = vmatpush1.xpose.msra.mxu0 0.0
        %971 = vmatprep.subr.mxu0 0.0
        %972 = vmatpush1.xpose.msra.mxu0 0.0
        %973 = vmatprep.subr.mxu0 0.0
        %974 = vmatpush1.xpose.msra.mxu0 0.0
        %975 = vmatprep.subr.mxu0 0.0
        %976 = vmatpush1.xpose.msra.mxu0 0.0
        %977 = vmatprep.subr.mxu0 0.0
        %978 = vmatpush1.xpose.msra.mxu0 0.0
        %979 = vmatprep.mubr.f32.mxu0 0.0
        %980 = vmatmul.mubr.f32.gmra.mrb[0].mxu0 %v909
        %v981 = vpop.f32.mrb[0].mxu0
        %v982 = vadd.f32 0.0, %v981
        %v983 = vpop.f32.mrb[0].mxu0
        %984 = vdwg.mxu0
        %v985 = vmul.f32 %v982, 0.35355338
        %v986 = vadd.f32 %v985, %v735
        %v987 = vmax.f32 %v986, -5.0
        %v988 = vmin.f32 %v987, 5.0
        %v989 = vmul.f32 %v988, 1.442695
        %v990 = vpow.pop %v989
        %v991 = vmul.f32 %v990, %v734
        %v992 = vsel %vm823, %v991, 0.0
        %993 = vadd.xlane.f32.xlu0 %v992
        %v994 = vpop.xlane.xlu0 %993
        %997 = vrot.lane.b32.xlu0 %v725, 120
        %v998 = vpop.permute.xlu0 %997
        %999 = vrot.lane.b32.xlu0 %v730, 120
        %v1000 = vpop.permute.xlu0 %999
        %v1004 = vsel %vm823, %v991, 0
        %1006 = vmatprep.subr.mxu0 0.0
        %1007 = vmatpush1.msra.mxu0 %v998
        %1008 = vmatprep.subr.mxu0 0.0
        %1009 = vmatpush1.msra.mxu0 %v1000
        %1010 = vmatprep.subr.mxu0 0.0
        %1011 = vmatpush1.msra.mxu0 0.0
        %1012 = vmatprep.subr.mxu0 0.0
        %1013 = vmatpush1.msra.mxu0 0.0
        %1014 = vmatprep.subr.mxu0 0.0
        %1015 = vmatpush1.msra.mxu0 0.0
        %1016 = vmatprep.subr.mxu0 0.0
        %1017 = vmatpush1.msra.mxu0 0.0
        %1018 = vmatprep.subr.mxu0 0.0
        %1019 = vmatpush1.msra.mxu0 0.0
        %1020 = vmatprep.subr.mxu0 0.0
        %1021 = vmatpush1.msra.mxu0 0.0
        %1022 = vmatprep.subr.mxu0 0.0
        %1023 = vmatpush1.msra.mxu0 0.0
        %1024 = vmatprep.subr.mxu0 0.0
        %1025 = vmatpush1.msra.mxu0 0.0
        %1026 = vmatprep.subr.mxu0 0.0
        %1027 = vmatpush1.msra.mxu0 0.0
        %1028 = vmatprep.subr.mxu0 0.0
        %1029 = vmatpush1.msra.mxu0 0.0
        %1030 = vmatprep.subr.mxu0 0.0
        %1031 = vmatpush1.msra.mxu0 0.0
        %1032 = vmatprep.subr.mxu0 0.0
        %1033 = vmatpush1.msra.mxu0 0.0
        %1034 = vmatprep.subr.mxu0 0.0
        %1035 = vmatpush1.msra.mxu0 0.0
        %1036 = vmatprep.subr.mxu0 0.0
        %1037 = vmatpush1.msra.mxu0 0.0
        %1038 = vmatprep.subr.mxu0 0.0
        %1039 = vmatpush1.msra.mxu0 0.0
        %1040 = vmatprep.subr.mxu0 0.0
        %1041 = vmatpush1.msra.mxu0 0.0
        %1042 = vmatprep.subr.mxu0 0.0
        %1043 = vmatpush1.msra.mxu0 0.0
        %1044 = vmatprep.subr.mxu0 0.0
        %1045 = vmatpush1.msra.mxu0 0.0
        %1046 = vmatprep.subr.mxu0 0.0
        %1047 = vmatpush1.msra.mxu0 0.0
        %1048 = vmatprep.subr.mxu0 0.0
        %1049 = vmatpush1.msra.mxu0 0.0
        %1050 = vmatprep.subr.mxu0 0.0
        %1051 = vmatpush1.msra.mxu0 0.0
        %1052 = vmatprep.subr.mxu0 0.0
        %1053 = vmatpush1.msra.mxu0 0.0
        %1054 = vmatprep.subr.mxu0 0.0
        %1055 = vmatpush1.msra.mxu0 0.0
        %1056 = vmatprep.subr.mxu0 0.0
        %1057 = vmatpush1.msra.mxu0 0.0
        %1058 = vmatprep.subr.mxu0 0.0
        %1059 = vmatpush1.msra.mxu0 0.0
        %1060 = vmatprep.subr.mxu0 0.0
        %1061 = vmatpush1.msra.mxu0 0.0
        %1062 = vmatprep.subr.mxu0 0.0
        %1063 = vmatpush1.msra.mxu0 0.0
        %1064 = vmatprep.subr.mxu0 0.0
        %1065 = vmatpush1.msra.mxu0 0.0
        %1066 = vmatprep.subr.mxu0 0.0
        %1067 = vmatpush1.msra.mxu0 0.0
        %1068 = vmatprep.subr.mxu0 0.0
        %1069 = vmatpush1.msra.mxu0 0.0
        %1070 = vmatprep.mubr.f32.mxu0 0.0
        %1071 = vmatmul.mubr.f32.gmra.mrb[0].mxu0 %v1004
        %v1072 = vpop.f32.mrb[0].mxu0
        %v1073 = vadd.f32 0.0, %v1072
        %v1074 = vpop.f32.mrb[0].mxu0
        %1075 = vdwg.mxu0
        %v1076 = vadd.f32 %v994, 1e-06
        %v1077 = vrcp.pop %v1076
        %v1078 = vmul.f32 %v1073, %v1077
        %1079 = vrot.lane.b32.xlu0 %v552, 112
        %v1080 = vpop.permute.xlu0 %1079
        %1081 = vrot.lane.b32.xlu0 %v639, 112
        %v1082 = vpop.permute.xlu0 %1081
        %1083 = vrot.lane.b32.xlu0 %v644, 112
        %v1084 = vpop.permute.xlu0 %1083
        %v1085 = vsel %vm736, %v1080, 0
        %v1087 = vsel %vm736, %v1082, 0
        %v1089 = vsel %vm736, %v1084, 0
        %1091 = vmatprep.subr.mxu0 0.0
        %1092 = vmatpush1.xpose.msra.mxu0 %v1087
        %1093 = vmatprep.subr.mxu0 0.0
        %1094 = vmatpush1.xpose.msra.mxu0 %v1089
        %1095 = vmatprep.subr.mxu0 0.0
        %1096 = vmatpush1.xpose.msra.mxu0 0.0
        %1097 = vmatprep.subr.mxu0 0.0
        %1098 = vmatpush1.xpose.msra.mxu0 0.0
        %1099 = vmatprep.subr.mxu0 0.0
        %1100 = vmatpush1.xpose.msra.mxu0 0.0
        %1101 = vmatprep.subr.mxu0 0.0
        %1102 = vmatpush1.xpose.msra.mxu0 0.0
        %1103 = vmatprep.subr.mxu0 0.0
        %1104 = vmatpush1.xpose.msra.mxu0 0.0
        %1105 = vmatprep.subr.mxu0 0.0
        %1106 = vmatpush1.xpose.msra.mxu0 0.0
        %1107 = vmatprep.subr.mxu0 0.0
        %1108 = vmatpush1.xpose.msra.mxu0 0.0
        %1109 = vmatprep.subr.mxu0 0.0
        %1110 = vmatpush1.xpose.msra.mxu0 0.0
        %1111 = vmatprep.subr.mxu0 0.0
        %1112 = vmatpush1.xpose.msra.mxu0 0.0
        %1113 = vmatprep.subr.mxu0 0.0
        %1114 = vmatpush1.xpose.msra.mxu0 0.0
        %1115 = vmatprep.subr.mxu0 0.0
        %1116 = vmatpush1.xpose.msra.mxu0 0.0
        %1117 = vmatprep.subr.mxu0 0.0
        %1118 = vmatpush1.xpose.msra.mxu0 0.0
        %1119 = vmatprep.subr.mxu0 0.0
        %1120 = vmatpush1.xpose.msra.mxu0 0.0
        %1121 = vmatprep.subr.mxu0 0.0
        %1122 = vmatpush1.xpose.msra.mxu0 0.0
        %1123 = vmatprep.subr.mxu0 0.0
        %1124 = vmatpush1.xpose.msra.mxu0 0.0
        %1125 = vmatprep.subr.mxu0 0.0
        %1126 = vmatpush1.xpose.msra.mxu0 0.0
        %1127 = vmatprep.subr.mxu0 0.0
        %1128 = vmatpush1.xpose.msra.mxu0 0.0
        %1129 = vmatprep.subr.mxu0 0.0
        %1130 = vmatpush1.xpose.msra.mxu0 0.0
        %1131 = vmatprep.subr.mxu0 0.0
        %1132 = vmatpush1.xpose.msra.mxu0 0.0
        %1133 = vmatprep.subr.mxu0 0.0
        %1134 = vmatpush1.xpose.msra.mxu0 0.0
        %1135 = vmatprep.subr.mxu0 0.0
        %1136 = vmatpush1.xpose.msra.mxu0 0.0
        %1137 = vmatprep.subr.mxu0 0.0
        %1138 = vmatpush1.xpose.msra.mxu0 0.0
        %1139 = vmatprep.subr.mxu0 0.0
        %1140 = vmatpush1.xpose.msra.mxu0 0.0
        %1141 = vmatprep.subr.mxu0 0.0
        %1142 = vmatpush1.xpose.msra.mxu0 0.0
        %1143 = vmatprep.subr.mxu0 0.0
        %1144 = vmatpush1.xpose.msra.mxu0 0.0
        %1145 = vmatprep.subr.mxu0 0.0
        %1146 = vmatpush1.xpose.msra.mxu0 0.0
        %1147 = vmatprep.subr.mxu0 0.0
        %1148 = vmatpush1.xpose.msra.mxu0 0.0
        %1149 = vmatprep.subr.mxu0 0.0
        %1150 = vmatpush1.xpose.msra.mxu0 0.0
        %1151 = vmatprep.subr.mxu0 0.0
        %1152 = vmatpush1.xpose.msra.mxu0 0.0
        %1153 = vmatprep.subr.mxu0 0.0
        %1154 = vmatpush1.xpose.msra.mxu0 0.0
        %1155 = vmatprep.mubr.f32.mxu0 0.0
        %1156 = vmatmul.mubr.f32.gmra.mrb[0].mxu0 %v1085
        %v1157 = vpop.f32.mrb[0].mxu0
        %v1158 = vadd.f32 0.0, %v1157
        %v1159 = vpop.f32.mrb[0].mxu0
        %1160 = vdwg.mxu0
        %v1161 = vmul.f32 %v1158, 0.35355338
        %v1162 = vadd.f32 %v1161, %v735
        %v1163 = vmax.f32 %v1162, -5.0
        %v1164 = vmin.f32 %v1163, 5.0
        %v1165 = vmul.f32 %v1164, 1.442695
        %v1166 = vpow.pop %v1165
        %v1167 = vmul.f32 %v1166, %v734
        %v1168 = vsel %vm823, %v1167, 0.0
        %1169 = vadd.xlane.f32.xlu0 %v1168
        %v1170 = vpop.xlane.xlu0 %1169
        %1171 = vrot.lane.b32.xlu0 %v725, 112
        %v1172 = vpop.permute.xlu0 %1171
        %1173 = vrot.lane.b32.xlu0 %v730, 112
        %v1174 = vpop.permute.xlu0 %1173
        %v1178 = vsel %vm823, %v1167, 0
        %1180 = vmatprep.subr.mxu0 0.0
        %1181 = vmatpush1.msra.mxu0 %v1172
        %1182 = vmatprep.subr.mxu0 0.0
        %1183 = vmatpush1.msra.mxu0 %v1174
        %1184 = vmatprep.subr.mxu0 0.0
        %1185 = vmatpush1.msra.mxu0 0.0
        %1186 = vmatprep.subr.mxu0 0.0
        %1187 = vmatpush1.msra.mxu0 0.0
        %1188 = vmatprep.subr.mxu0 0.0
        %1189 = vmatpush1.msra.mxu0 0.0
        %1190 = vmatprep.subr.mxu0 0.0
        %1191 = vmatpush1.msra.mxu0 0.0
        %1192 = vmatprep.subr.mxu0 0.0
        %1193 = vmatpush1.msra.mxu0 0.0
        %1194 = vmatprep.subr.mxu0 0.0
        %1195 = vmatpush1.msra.mxu0 0.0
        %1196 = vmatprep.subr.mxu0 0.0
        %1197 = vmatpush1.msra.mxu0 0.0
        %1198 = vmatprep.subr.mxu0 0.0
        %1199 = vmatpush1.msra.mxu0 0.0
        %1200 = vmatprep.subr.mxu0 0.0
        %1201 = vmatpush1.msra.mxu0 0.0
        %1202 = vmatprep.subr.mxu0 0.0
        %1203 = vmatpush1.msra.mxu0 0.0
        %1204 = vmatprep.subr.mxu0 0.0
        %1205 = vmatpush1.msra.mxu0 0.0
        %1206 = vmatprep.subr.mxu0 0.0
        %1207 = vmatpush1.msra.mxu0 0.0
        %1208 = vmatprep.subr.mxu0 0.0
        %1209 = vmatpush1.msra.mxu0 0.0
        %1210 = vmatprep.subr.mxu0 0.0
        %1211 = vmatpush1.msra.mxu0 0.0
        %1212 = vmatprep.subr.mxu0 0.0
        %1213 = vmatpush1.msra.mxu0 0.0
        %1214 = vmatprep.subr.mxu0 0.0
        %1215 = vmatpush1.msra.mxu0 0.0
        %1216 = vmatprep.subr.mxu0 0.0
        %1217 = vmatpush1.msra.mxu0 0.0
        %1218 = vmatprep.subr.mxu0 0.0
        %1219 = vmatpush1.msra.mxu0 0.0
        %1220 = vmatprep.subr.mxu0 0.0
        %1221 = vmatpush1.msra.mxu0 0.0
        %1222 = vmatprep.subr.mxu0 0.0
        %1223 = vmatpush1.msra.mxu0 0.0
        %1224 = vmatprep.subr.mxu0 0.0
        %1225 = vmatpush1.msra.mxu0 0.0
        %1226 = vmatprep.subr.mxu0 0.0
        %1227 = vmatpush1.msra.mxu0 0.0
        %1228 = vmatprep.subr.mxu0 0.0
        %1229 = vmatpush1.msra.mxu0 0.0
        %1230 = vmatprep.subr.mxu0 0.0
        %1231 = vmatpush1.msra.mxu0 0.0
        %1232 = vmatprep.subr.mxu0 0.0
        %1233 = vmatpush1.msra.mxu0 0.0
        %1234 = vmatprep.subr.mxu0 0.0
        %1235 = vmatpush1.msra.mxu0 0.0
        %1236 = vmatprep.subr.mxu0 0.0
        %1237 = vmatpush1.msra.mxu0 0.0
        %1238 = vmatprep.subr.mxu0 0.0
        %1239 = vmatpush1.msra.mxu0 0.0
        %1240 = vmatprep.subr.mxu0 0.0
        %1241 = vmatpush1.msra.mxu0 0.0
        %1242 = vmatprep.subr.mxu0 0.0
        %1243 = vmatpush1.msra.mxu0 0.0
        %1244 = vmatprep.mubr.f32.mxu0 0.0
        %1245 = vmatmul.mubr.f32.gmra.mrb[0].mxu0 %v1178
        %v1246 = vpop.f32.mrb[0].mxu0
        %v1247 = vadd.f32 0.0, %v1246
        %v1248 = vpop.f32.mrb[0].mxu0
        %1249 = vdwg.mxu0
        %v1250 = vadd.f32 %v1170, 1e-06
        %v1251 = vrcp.pop %v1250
        %v1252 = vmul.f32 %v1247, %v1251
        %1253 = vrot.lane.b32.xlu0 %v552, 104
        %v1254 = vpop.permute.xlu0 %1253
        %1255 = vrot.lane.b32.xlu0 %v639, 104
        %v1256 = vpop.permute.xlu0 %1255
        %1257 = vrot.lane.b32.xlu0 %v644, 104
        %v1258 = vpop.permute.xlu0 %1257
        %v1259 = vsel %vm736, %v1254, 0
        %v1261 = vsel %vm736, %v1256, 0
        %v1263 = vsel %vm736, %v1258, 0
        %1265 = vmatprep.subr.mxu0 0.0
        %1266 = vmatpush1.xpose.msra.mxu0 %v1261
        %1267 = vmatprep.subr.mxu0 0.0
        %1268 = vmatpush1.xpose.msra.mxu0 %v1263
        %1269 = vmatprep.subr.mxu0 0.0
        %1270 = vmatpush1.xpose.msra.mxu0 0.0
        %1271 = vmatprep.subr.mxu0 0.0
        %1272 = vmatpush1.xpose.msra.mxu0 0.0
        %1273 = vmatprep.subr.mxu0 0.0
        %1274 = vmatpush1.xpose.msra.mxu0 0.0
        %1275 = vmatprep.subr.mxu0 0.0
        %1276 = vmatpush1.xpose.msra.mxu0 0.0
        %1277 = vmatprep.subr.mxu0 0.0
        %1278 = vmatpush1.xpose.msra.mxu0 0.0
        %1279 = vmatprep.subr.mxu0 0.0
        %1280 = vmatpush1.xpose.msra.mxu0 0.0
        %1281 = vmatprep.subr.mxu0 0.0
        %1282 = vmatpush1.xpose.msra.mxu0 0.0
        %1283 = vmatprep.subr.mxu0 0.0
        %1284 = vmatpush1.xpose.msra.mxu0 0.0
        %1285 = vmatprep.subr.mxu0 0.0
        %1286 = vmatpush1.xpose.msra.mxu0 0.0
        %1287 = vmatprep.subr.mxu0 0.0
        %1288 = vmatpush1.xpose.msra.mxu0 0.0
        %1289 = vmatprep.subr.mxu0 0.0
        %1290 = vmatpush1.xpose.msra.mxu0 0.0
        %1291 = vmatprep.subr.mxu0 0.0
        %1292 = vmatpush1.xpose.msra.mxu0 0.0
        %1293 = vmatprep.subr.mxu0 0.0
        %1294 = vmatpush1.xpose.msra.mxu0 0.0
        %1295 = vmatprep.subr.mxu0 0.0
        %1296 = vmatpush1.xpose.msra.mxu0 0.0
        %1297 = vmatprep.subr.mxu0 0.0
        %1298 = vmatpush1.xpose.msra.mxu0 0.0
        %1299 = vmatprep.subr.mxu0 0.0
        %1300 = vmatpush1.xpose.msra.mxu0 0.0
        %1301 = vmatprep.subr.mxu0 0.0
        %1302 = vmatpush1.xpose.msra.mxu0 0.0
        %1303 = vmatprep.subr.mxu0 0.0
        %1304 = vmatpush1.xpose.msra.mxu0 0.0
        %1305 = vmatprep.subr.mxu0 0.0
        %1306 = vmatpush1.xpose.msra.mxu0 0.0
        %1307 = vmatprep.subr.mxu0 0.0
        %1308 = vmatpush1.xpose.msra.mxu0 0.0
        %1309 = vmatprep.subr.mxu0 0.0
        %1310 = vmatpush1.xpose.msra.mxu0 0.0
        %1311 = vmatprep.subr.mxu0 0.0
        %1312 = vmatpush1.xpose.msra.mxu0 0.0
        %1313 = vmatprep.subr.mxu0 0.0
        %1314 = vmatpush1.xpose.msra.mxu0 0.0
        %1315 = vmatprep.subr.mxu0 0.0
        %1316 = vmatpush1.xpose.msra.mxu0 0.0
        %1317 = vmatprep.subr.mxu0 0.0
        %1318 = vmatpush1.xpose.msra.mxu0 0.0
        %1319 = vmatprep.subr.mxu0 0.0
        %1320 = vmatpush1.xpose.msra.mxu0 0.0
        %1321 = vmatprep.subr.mxu0 0.0
        %1322 = vmatpush1.xpose.msra.mxu0 0.0
        %1323 = vmatprep.subr.mxu0 0.0
        %1324 = vmatpush1.xpose.msra.mxu0 0.0
        %1325 = vmatprep.subr.mxu0 0.0
        %1326 = vmatpush1.xpose.msra.mxu0 0.0
        %1327 = vmatprep.subr.mxu0 0.0
        %1328 = vmatpush1.xpose.msra.mxu0 0.0
        %1329 = vmatprep.mubr.f32.mxu0 0.0
        %1330 = vmatmul.mubr.f32.gmra.mrb[0].mxu0 %v1259
        %v1331 = vpop.f32.mrb[0].mxu0
        %v1332 = vadd.f32 0.0, %v1331
        %v1333 = vpop.f32.mrb[0].mxu0
        %1334 = vdwg.mxu0
        %v1335 = vmul.f32 %v1332, 0.35355338
        %v1336 = vadd.f32 %v1335, %v735
        %v1337 = vmax.f32 %v1336, -5.0
        %v1338 = vmin.f32 %v1337, 5.0
        %v1339 = vmul.f32 %v1338, 1.442695
        %v1340 = vpow.pop %v1339
        %v1341 = vmul.f32 %v1340, %v734
        %v1342 = vsel %vm823, %v1341, 0.0
        %1343 = vadd.xlane.f32.xlu0 %v1342
        %v1344 = vpop.xlane.xlu0 %1343
        %1345 = vrot.lane.b32.xlu0 %v725, 104
        %v1346 = vpop.permute.xlu0 %1345
        %1347 = vrot.lane.b32.xlu0 %v730, 104
        %v1348 = vpop.permute.xlu0 %1347
        %v1352 = vsel %vm823, %v1341, 0
        %1354 = vmatprep.subr.mxu0 0.0
        %1355 = vmatpush1.msra.mxu0 %v1346
        %1356 = vmatprep.subr.mxu0 0.0
        %1357 = vmatpush1.msra.mxu0 %v1348
        %1358 = vmatprep.subr.mxu0 0.0
        %1359 = vmatpush1.msra.mxu0 0.0
        %1360 = vmatprep.subr.mxu0 0.0
        %1361 = vmatpush1.msra.mxu0 0.0
        %1362 = vmatprep.subr.mxu0 0.0
        %1363 = vmatpush1.msra.mxu0 0.0
        %1364 = vmatprep.subr.mxu0 0.0
        %1365 = vmatpush1.msra.mxu0 0.0
        %1366 = vmatprep.subr.mxu0 0.0
        %1367 = vmatpush1.msra.mxu0 0.0
        %1368 = vmatprep.subr.mxu0 0.0
        %1369 = vmatpush1.msra.mxu0 0.0
        %1370 = vmatprep.subr.mxu0 0.0
        %1371 = vmatpush1.msra.mxu0 0.0
        %1372 = vmatprep.subr.mxu0 0.0
        %1373 = vmatpush1.msra.mxu0 0.0
        %1374 = vmatprep.subr.mxu0 0.0
        %1375 = vmatpush1.msra.mxu0 0.0
        %1376 = vmatprep.subr.mxu0 0.0
        %1377 = vmatpush1.msra.mxu0 0.0
        %1378 = vmatprep.subr.mxu0 0.0
        %1379 = vmatpush1.msra.mxu0 0.0
        %1380 = vmatprep.subr.mxu0 0.0
        %1381 = vmatpush1.msra.mxu0 0.0
        %1382 = vmatprep.subr.mxu0 0.0
        %1383 = vmatpush1.msra.mxu0 0.0
        %1384 = vmatprep.subr.mxu0 0.0
        %1385 = vmatpush1.msra.mxu0 0.0
        %1386 = vmatprep.subr.mxu0 0.0
        %1387 = vmatpush1.msra.mxu0 0.0
        %1388 = vmatprep.subr.mxu0 0.0
        %1389 = vmatpush1.msra.mxu0 0.0
        %1390 = vmatprep.subr.mxu0 0.0
        %1391 = vmatpush1.msra.mxu0 0.0
        %1392 = vmatprep.subr.mxu0 0.0
        %1393 = vmatpush1.msra.mxu0 0.0
        %1394 = vmatprep.subr.mxu0 0.0
        %1395 = vmatpush1.msra.mxu0 0.0
        %1396 = vmatprep.subr.mxu0 0.0
        %1397 = vmatpush1.msra.mxu0 0.0
        %1398 = vmatprep.subr.mxu0 0.0
        %1399 = vmatpush1.msra.mxu0 0.0
        %1400 = vmatprep.subr.mxu0 0.0
        %1401 = vmatpush1.msra.mxu0 0.0
        %1402 = vmatprep.subr.mxu0 0.0
        %1403 = vmatpush1.msra.mxu0 0.0
        %1404 = vmatprep.subr.mxu0 0.0
        %1405 = vmatpush1.msra.mxu0 0.0
        %1406 = vmatprep.subr.mxu0 0.0
        %1407 = vmatpush1.msra.mxu0 0.0
        %1408 = vmatprep.subr.mxu0 0.0
        %1409 = vmatpush1.msra.mxu0 0.0
        %1410 = vmatprep.subr.mxu0 0.0
        %1411 = vmatpush1.msra.mxu0 0.0
        %1412 = vmatprep.subr.mxu0 0.0
        %1413 = vmatpush1.msra.mxu0 0.0
        %1414 = vmatprep.subr.mxu0 0.0
        %1415 = vmatpush1.msra.mxu0 0.0
        %1416 = vmatprep.subr.mxu0 0.0
        %1417 = vmatpush1.msra.mxu0 0.0
        %1418 = vmatprep.mubr.f32.mxu0 0.0
        %1419 = vmatmul.mubr.f32.gmra.mrb[0].mxu0 %v1352
        %v1420 = vpop.f32.mrb[0].mxu0
        %v1421 = vadd.f32 0.0, %v1420
        %v1422 = vpop.f32.mrb[0].mxu0
        %1423 = vdwg.mxu0
        %v1424 = vadd.f32 %v1344, 1e-06
        %v1425 = vrcp.pop %v1424
        %v1426 = vmul.f32 %v1421, %v1425
        %1428 = vrot.lane.b32.xlu0 %v1078, 8
        %v1429 = vpop.permute.xlu0 %1428
        %1432 = vrot.lane.b32.xlu0 %v1252, 16
        %v1433 = vpop.permute.xlu0 %1432
        %1436 = vrot.lane.b32.xlu0 %v1426, 24
        %v1437 = vpop.permute.xlu0 %1436
        %v1439 = vsel %vm736, %v902, %v1429
        %v1440 = vsel %vm823, %v1439, %v1433
        %vm1441 = vcmask 195584
        %v1442 = vsel %vm1441, %v1440, %v1437
        %1443 = vst.msk [vmem:[%s458] sm:$0xff] %vm481, %v1442
        %s1444 = sand.u32 %s262, 1
        %s1445 = scalar_lea.sflag [#allocation4], %s1444
        %s1446 = sand.u32 %s262, 1
        %s1447 = smul.addr %s1446, 8
        %s1448 = scalar_lea.vmem [#allocation11], %s1447
        // Predicated region
        $region81: #{tpu_custom_call.1} parent=59 // pred_check
          %p1449 = pneg %p272
        $region82: #{tpu_custom_call.1} parent=59 // pred_check_branch
          %1451 = sbr.rel (%p1449) target = $region84
        $region83: #{tpu_custom_call.1} parent=59 // pred_region
          %s1453 = ssub.s32 128, 128
          %1454 = vsyncadd %s1445, %s1453
          %s1455 = smul.addr %s29, 128
          %s1456 = scalar_lea.hbm %s10, %s1455
          %s1458 = sshll.u32 %s1448, 4
          %s1459 = int_to_ptr.vmem [resolvable:$true] %s1458
          %1461 = dma.vmem_to_hbm [thread:$0]  %s1459, 128, %s1456, %s1445
        $region84: #{tpu_custom_call.1} parent=59 // pred_fallthru
          _
      $region60: #{tpu_custom_call.1} parent=5 // pred_fallthru
        _
      %p1462 = scmp.le.s32.totalorder 2, %s24
      // Predicated region
      $region85: #{tpu_custom_call.1} parent=5 // pred_check
        %p1463 = pneg %p1462
      $region86: #{tpu_custom_call.1} parent=5 // pred_check_branch
        %1465 = sbr.rel (%p1463) target = $region88
      $region87: #{tpu_custom_call.1} parent=5 // pred_region
        %s1466 = ssub.s32 %s24, 2
        // Predicated region
        $region89: #{tpu_custom_call.1} parent=87 // pred_check
          %p1467 = pneg %p278
        $region90: #{tpu_custom_call.1} parent=87 // pred_check_branch
          %1469 = sbr.rel (%p1467) target = $region92
        $region91: #{tpu_custom_call.1} parent=87 // pred_region
          %s1470 = sand.u32 %s263, 1
          %s1471 = scalar_lea.sflag [#allocation4], %s1470
          %s1472 = sand.u32 %s263, 1
          %s1473 = smul.addr %s1472, 8
          %s1474 = scalar_lea.vmem [#allocation11], %s1473
          %1475 = dma.done %s1471, 128
        $region92: #{tpu_custom_call.1} parent=87 // pred_fallthru
          _
      $region88: #{tpu_custom_call.1} parent=5 // pred_fallthru
        _
    $region6: #{tpu_custom_call.1} parent=1 // loop_footer
      %s28 = sadd.s32 1, %s24
    $region7: #{tpu_custom_call.1} parent=1 // loop_footer_branch
      %23 = sbr.rel target = $region3
    $region8: #{tpu_custom_call.1} parent=1 // loop_exit
      _
    %1476 = vsyncpa [#allocation3], 1
    %s1477 = scalar_lea.sflag [#allocation3], 1
    %1478 = vsyncpa %s1477, 1
    %1479 = vsyncpa [#allocation6], 1
    %1480 = vsyncpa [#allocation9], 1
    %1481 = vsyncpa [#allocation4], 1
    %s1482 = scalar_lea.sflag [#allocation4], 1
    %1483 = vsyncpa %s1482, 1

</llo_original>
